<compile_context>
chip_gen: v7x
topology: tpu7x:2x2x1
jax: 0.10.0
libtpu: 0.0.40
codegen_flags: <defaults>
</compile_context>

<pallas_src>
import math

import jax
import jax.numpy as jnp
from jax.experimental import pallas as pl
from jax.experimental.pallas import tpu as pltpu

_INV_SQRT2 = 1.0 / math.sqrt(2.0)
_LN_EPS = 1e-5

# Set True to use the tanh GELU (runs on the otherwise-idle EUP slot) instead of the exact
# erf polynomial (VALU). Off by default: it changes numerics vs torch's exact gelu.
_APPROX_GELU = False


def _gelu(x):
    if _APPROX_GELU:
        return jax.nn.gelu(x, approximate=True)
    return 0.5 * x * (1.0 + jax.lax.erf(x * _INV_SQRT2))


def _layernorm(x, gamma, beta, eps=_LN_EPS):
    # Single-pass stats (E[x^2] - mu^2): one read of the operand / one XLU reduce pair.
    mu = jnp.mean(x, axis=-1, keepdims=True)
    ex2 = jnp.mean(x * x, axis=-1, keepdims=True)
    var = jnp.maximum(ex2 - mu * mu, 0.0)
    return (x - mu) * jax.lax.rsqrt(var + eps) * gamma + beta


def linear_layer_kernel(x_ref, g1_ref, b1_ref,
                        wuu_ref, buu_ref, wuv_ref, buv_ref,
                        gn_ref, bn_ref, ws_ref, bs_ref,
                        wv_ref, bv_ref, g2_ref, b2_ref,
                        o_ref):
    BB, T, H = x_ref.shape
    F = wuu_ref.shape[1]
    rows = BB * T

    x = x_ref[...].astype(jnp.float32).reshape(rows, H)

    # ---- LayerNorm1 (single-pass stats). Only the (rows,1) mu/rstd survive so `skip`
    # can be rebuilt at the end from a fresh x read (no (rows,H) f32 lives across the
    # matmuls -> lower VMEM/vreg pressure at real sizes).
    mu = jnp.mean(x, axis=-1, keepdims=True)
    ex2 = jnp.mean(x * x, axis=-1, keepdims=True)
    var = jnp.maximum(ex2 - mu * mu, 0.0)
    rstd = jax.lax.rsqrt(var + _LN_EPS)
    xn = (x - mu) * rstd * g1_ref[...] + b1_ref[...]

    # ---- U_map + gelu, with the weight pre-split into u / v halves so the (rows, 2F)
    # intermediate and its cross-tile slicing never materialize. bf16 operands, f32 acc.
    # v first (gelu -> SGU-LN -> bf16), then u (gelu -> bf16): only one (rows,F) f32 half
    # is live at a time and the surviving copies are bf16 (packed VPU on v6e/v7x).
    xb = xn.astype(jnp.bfloat16)
    v = _gelu(jnp.dot(xb, wuv_ref[...], preferred_element_type=jnp.float32) + buv_ref[...])
    v = _layernorm(v, gn_ref[...], bn_ref[...]).astype(jnp.bfloat16)
    u = _gelu(jnp.dot(xb, wuu_ref[...], preferred_element_type=jnp.float32)
              + buu_ref[...]).astype(jnp.bfloat16)

    # ---- SpatialGatingUnit (tiny_attn=False): Conv1d(seq, seq, k=1) == one (T,T) matmul
    # over the sequence axis. Rearrange the b-major (BB*T, F) slabs into (T, BB*F) via
    # static lane-aligned concats (feature dim stays on lanes, no lane transpose), so ws
    # is pushed to the MXU exactly once per grid step with N = BB*F filling the lanes.
    u3 = u.reshape(BB, T, F)
    v3 = v.reshape(BB, T, F)
    u2 = jnp.concatenate([u3[b] for b in range(BB)], axis=-1)          # (T, BB*F) bf16
    v2 = jnp.concatenate([v3[b] for b in range(BB)], axis=-1)          # (T, BB*F) bf16
    vs = jnp.dot(ws_ref[...], v2, preferred_element_type=jnp.float32) + bs_ref[...]
    h2 = u2 * vs.astype(jnp.bfloat16)                                  # gating product, bf16

    # back to b-major (BB*T, F) rows for V_map (static lane slices stacked on sublanes)
    h = jnp.concatenate([h2[:, b * F:(b + 1) * F] for b in range(BB)], axis=0)

    # ---- V_map + LayerNorm2 + gelu
    y = jnp.dot(h, wv_ref[...], preferred_element_type=jnp.float32) + bv_ref[...]
    y = _gelu(_layernorm(y, g2_ref[...], b2_ref[...]))

    # ---- residual average: rebuild skip = LN1(x) from a fresh x read + saved stats
    skip = (x_ref[...].astype(jnp.float32).reshape(rows, H) - mu) * rstd \
        * g1_ref[...] + b1_ref[...]
    o_ref[...] = ((skip + y) * 0.5).reshape(BB, T, -1).astype(o_ref.dtype)


def _chip_profile():
    """Generation-aware grid / VMEM policy."""
    kind = ""
    try:
        kind = jax.devices()[0].device_kind.lower()
    except Exception:
        pass
    if "v7" in kind:
        # 2 TensorCores/chip, 64 MiB VMEM per TC: >=2 grid steps per core, small budget.
        return dict(min_steps=4, vmem_limit=48 * 1024 * 1024, max_rows=512)
    if ("lite" in kind) or ("v5e" in kind) or ("v6" in kind):
        # single TensorCore, 128 MiB VMEM: grid=1 is fine, grow the block instead.
        return dict(min_steps=1, vmem_limit=96 * 1024 * 1024, max_rows=2048)
    if ("v4" in kind) or ("v5" in kind):
        # megacore: 2 TCs share the 'parallel' grid axis, 128 MiB VMEM.
        return dict(min_steps=4, vmem_limit=96 * 1024 * 1024, max_rows=1024)
    # unknown generation: conservative on VMEM and steps.
    return dict(min_steps=2, vmem_limit=48 * 1024 * 1024, max_rows=512)


def _pick_block_batch(B, T, H, F, OUT, prof, weight_bytes, cap=32):
    """Largest divisor BB of B (<= cap) whose working set fits the VMEM budget, preferring
    enough grid steps (min_steps) so every TensorCore gets >=2 iterations to pipeline."""
    budget = int(prof["vmem_limit"] * 0.7) - 2 * weight_bytes   # weights may be double-buffered
    budget = max(budget, 1 << 20)

    def fits(bb):
        rows = bb * T
        io = 2 * rows * (H + OUT) * 4                            # double-buffered x / out blocks
        live = rows * (H * 4 + F * 4 + 2 * F * 2 + F * 4 + OUT * 4)  # xn, f32 half, u2/v2 bf16, vs, y
        return io + live <= budget

    cands = [d for d in range(1, min(B, cap) + 1)
             if B % d == 0 and d * T <= prof["max_rows"] and fits(d)]
    if not cands:
        return 1
    stepped = [d for d in cands if B // d >= prof["min_steps"]]
    return max(stepped) if stepped else max(cands)


def linear_layer_forward(x, p, block_batch=None):
    B, T, H = x.shape
    F = p["wu_u"].shape[1]
    OUT = p["wv"].shape[1]
    assert H == OUT, "residual (skip + y)/2 requires hidden_dim == out_dim"
    assert p["ws"].shape == (T, T), "spatial_proj built for a different seq length"
    assert T % 8 == 0, "T must be a multiple of 8 (sublane tile) to avoid relayout copies"
    assert H % 128 == 0 and F % 128 == 0 and OUT % 128 == 0, \
        "feature dims must be multiples of 128 (lane-dense stores / aligned lane slices)"

    prof = _chip_profile()
    weight_bytes = sum(int(v.size) * v.dtype.itemsize for v in p.values())
    BB = block_batch or _pick_block_batch(B, T, H, F, OUT, prof, weight_bytes)
    assert B % BB == 0, "block_batch must divide batch"

    def const_spec(arr):
        # Constant block index -> weight stays resident across the grid. (If a VMEM report
        # ever shows these double-buffered, pin them with pipeline_mode=pl.Buffered(1).)
        n = arr.ndim
        return pl.BlockSpec(arr.shape, lambda b, n=n: (0,) * n)

    in_specs = [
        pl.BlockSpec((BB, T, H), lambda b: (b, 0, 0)),            # x
        const_spec(p["g1"]), const_spec(p["b1"]),
        const_spec(p["wu_u"]), const_spec(p["bu_u"]),
        const_spec(p["wu_v"]), const_spec(p["bu_v"]),
        const_spec(p["gn"]), const_spec(p["bn"]),
        const_spec(p["ws"]), const_spec(p["bs"]),
        const_spec(p["wv"]), const_spec(p["bv"]),
        const_spec(p["g2"]), const_spec(p["b2"]),
    ]

    itemsize = x.dtype.itemsize
    flops = 2 * B * T * (H * F + H * F + T * F + F * OUT)
    transcendentals = B * T * (2 * F + OUT + 3)        # gelu over u,v,y + rsqrt per LN row
    bytes_accessed = int(x.size * itemsize + B * T * OUT * itemsize + weight_bytes)

    return pl.pallas_call(
        linear_layer_kernel,
        out_shape=jax.ShapeDtypeStruct((B, T, OUT), x.dtype),
        grid=(B // BB,),
        in_specs=in_specs,
        out_specs=pl.BlockSpec((BB, T, OUT), lambda b: (b, 0, 0)),
        compiler_params=pltpu.CompilerParams(
            dimension_semantics=("parallel",),
            vmem_limit_bytes=prof["vmem_limit"],
        ),
        cost_estimate=pl.CostEstimate(
            flops=flops, transcendentals=transcendentals, bytes_accessed=bytes_accessed),
    )(x, p["g1"], p["b1"], p["wu_u"], p["bu_u"], p["wu_v"], p["bu_v"],
      p["gn"], p["bn"], p["ws"], p["bs"], p["wv"], p["bv"], p["g2"], p["b2"])


def init_params(key, hidden_dim, ffn_dim, out_dim, timesteps):
    ks = jax.random.split(key, 5)
    # torch.nn.Linear weights stored (out, in); init N(0, 0.01) per module __init__
    wu = 0.01 * jax.random.normal(ks[0], (2 * ffn_dim, hidden_dim), jnp.float32)
    bu = 0.01 * jax.random.normal(ks[1], (2 * ffn_dim,), jnp.float32)
    wv = 0.01 * jax.random.normal(ks[2], (out_dim, ffn_dim), jnp.float32)
    bv = 0.01 * jax.random.normal(ks[3], (out_dim,), jnp.float32)
    # Conv1d(seq, seq, 1): weight init U(-1/sqrt(T), 1/sqrt(T)); bias set to 1.0 in SGU.__init__
    bound = 1.0 / math.sqrt(timesteps)
    ws = jax.random.uniform(ks[4], (timesteps, timesteps), jnp.float32, -bound, bound)
    bs = jnp.ones((timesteps,), jnp.float32)

    wu_t = wu.T                                        # (H, 2F) matmul layout
    return dict(
        g1=jnp.ones((1, hidden_dim), jnp.float32), b1=jnp.zeros((1, hidden_dim), jnp.float32),
        # bf16 weights (f32 accumulation on the MXU); U_map split into u/v halves
        wu_u=wu_t[:, :ffn_dim].astype(jnp.bfloat16),
        wu_v=wu_t[:, ffn_dim:].astype(jnp.bfloat16),
        bu_u=bu[:ffn_dim].reshape(1, -1), bu_v=bu[ffn_dim:].reshape(1, -1),
        gn=jnp.ones((1, ffn_dim), jnp.float32), bn=jnp.zeros((1, ffn_dim), jnp.float32),
        ws=ws.astype(jnp.bfloat16), bs=bs.reshape(-1, 1),
        wv=wv.T.astype(jnp.bfloat16), bv=bv.reshape(1, -1),
        g2=jnp.ones((1, out_dim), jnp.float32), b2=jnp.zeros((1, out_dim), jnp.float32),
    )


def _reference(x, p):
    # pure-JAX reference of the same forward, mirroring the kernel's quantization path
    # (bf16 matmul operands with f32 accumulation, bf16 gating product, f32 LN/gelu).
    xf = x.astype(jnp.float32)
    xn = _layernorm(xf, p["g1"], p["b1"])
    skip = xn
    xb = xn.astype(jnp.bfloat16)
    u = _gelu(jnp.einsum('bth,hf->btf', xb, p["wu_u"],
                         preferred_element_type=jnp.float32) + p["bu_u"])
    v = _gelu(jnp.einsum('bth,hf->btf', xb, p["wu_v"],
                         preferred_element_type=jnp.float32) + p["bu_v"])
    v = _layernorm(v, p["gn"], p["bn"]).astype(jnp.bfloat16)
    u = u.astype(jnp.bfloat16)
    vs = jnp.einsum('ts,bsf->btf', p["ws"], v,
                    preferred_element_type=jnp.float32) + p["bs"]
    h = u * vs.astype(jnp.bfloat16)
    y = jnp.einsum('btf,fo->bto', h, p["wv"],
                   preferred_element_type=jnp.float32) + p["bv"]
    y = _gelu(_layernorm(y, p["g2"], p["b2"]))
    return (skip + y) * 0.5


if __name__ == "__main__":
    # Lane-dense feature dims (multiples of 128; multiples of 256 would fill the v6e/v7x
    # MXU even better); hidden_dim == out_dim for the residual.
    B, T = 16, 16
    HIDDEN = FFN = OUT = 128
    key = jax.random.PRNGKey(0)
    kx, kp = jax.random.split(key)
    x = jax.random.normal(kx, (B, T, HIDDEN), jnp.float32)
    params = init_params(kp, HIDDEN, FFN, OUT, T)

    out = jax.block_until_ready(linear_layer_forward(x, params))

    ref = _reference(x, params)
    assert out.shape == (B, T, OUT)
    max_err = float(jnp.max(jnp.abs(out - ref)))
    assert jnp.allclose(out, ref, atol=2e-3, rtol=2e-3), \
        f"mismatch vs JAX reference (max abs err {max_err})"
    print("KERNEL_OK")
</pallas_src>

<mosaic_0001>
module attributes {stable_mosaic.version = 11 : i64} {
  func.func @linear_layer_kernel(%arg0: i32, %arg1: memref<8x16x128xf32, #tpu.memory_space<vmem>>, %arg2: memref<1x128xf32, #tpu.memory_space<vmem>>, %arg3: memref<1x128xf32, #tpu.memory_space<vmem>>, %arg4: memref<128x128xbf16, #tpu.memory_space<vmem>>, %arg5: memref<1x128xf32, #tpu.memory_space<vmem>>, %arg6: memref<128x128xbf16, #tpu.memory_space<vmem>>, %arg7: memref<1x128xf32, #tpu.memory_space<vmem>>, %arg8: memref<1x128xf32, #tpu.memory_space<vmem>>, %arg9: memref<1x128xf32, #tpu.memory_space<vmem>>, %arg10: memref<16x16xbf16, #tpu.memory_space<vmem>>, %arg11: memref<16x1xf32, #tpu.memory_space<vmem>>, %arg12: memref<128x128xbf16, #tpu.memory_space<vmem>>, %arg13: memref<1x128xf32, #tpu.memory_space<vmem>>, %arg14: memref<1x128xf32, #tpu.memory_space<vmem>>, %arg15: memref<1x128xf32, #tpu.memory_space<vmem>>, %arg16: memref<8x16x128xf32, #tpu.memory_space<vmem>>) attributes {dimension_semantics = [#tpu.dimension_semantics<parallel>], iteration_bounds = array<i64: 2>, scalar_prefetch = 0 : i64, scratch_operands = 0 : i64, tpu.core_type = #tpu.core_type<tc>, window_params = [{transform_indices = @transform_0, window_bounds = array<i64: 8, 16, 128>}, {pipeline_mode = #tpu.pipeline_mode<synchronous>, transform_indices = @transform_1, window_bounds = array<i64: 1, 128>}, {pipeline_mode = #tpu.pipeline_mode<synchronous>, transform_indices = @transform_2, window_bounds = array<i64: 1, 128>}, {pipeline_mode = #tpu.pipeline_mode<synchronous>, transform_indices = @transform_3, window_bounds = array<i64: 128, 128>}, {pipeline_mode = #tpu.pipeline_mode<synchronous>, transform_indices = @transform_4, window_bounds = array<i64: 1, 128>}, {pipeline_mode = #tpu.pipeline_mode<synchronous>, transform_indices = @transform_5, window_bounds = array<i64: 128, 128>}, {pipeline_mode = #tpu.pipeline_mode<synchronous>, transform_indices = @transform_6, window_bounds = array<i64: 1, 128>}, {pipeline_mode = #tpu.pipeline_mode<synchronous>, transform_indices = @transform_7, window_bounds = array<i64: 1, 128>}, {pipeline_mode = #tpu.pipeline_mode<synchronous>, transform_indices = @transform_8, window_bounds = array<i64: 1, 128>}, {pipeline_mode = #tpu.pipeline_mode<synchronous>, transform_indices = @transform_9, window_bounds = array<i64: 16, 16>}, {pipeline_mode = #tpu.pipeline_mode<synchronous>, transform_indices = @transform_10, window_bounds = array<i64: 16, 1>}, {pipeline_mode = #tpu.pipeline_mode<synchronous>, transform_indices = @transform_11, window_bounds = array<i64: 128, 128>}, {pipeline_mode = #tpu.pipeline_mode<synchronous>, transform_indices = @transform_12, window_bounds = array<i64: 1, 128>}, {pipeline_mode = #tpu.pipeline_mode<synchronous>, transform_indices = @transform_13, window_bounds = array<i64: 1, 128>}, {pipeline_mode = #tpu.pipeline_mode<synchronous>, transform_indices = @transform_14, window_bounds = array<i64: 1, 128>}, {transform_indices = @transform_15, window_bounds = array<i64: 8, 16, 128>}]} {
    %c0 = arith.constant 0 : index
    %c0_0 = arith.constant 0 : index
    %c0_1 = arith.constant 0 : index
    %0 = vector.load %arg1[%c0, %c0_0, %c0_1] : memref<8x16x128xf32, #tpu.memory_space<vmem>>, vector<8x16x128xf32>
    %1 = vector.shape_cast %0 : vector<8x16x128xf32> to vector<128x128xf32>
    %cst = arith.constant dense<0.000000e+00> : vector<128xf32>
    %2 = vector.multi_reduction <add>, %1, %cst [1] : vector<128x128xf32> to vector<128xf32>
    %3 = vector.shape_cast %2 : vector<128xf32> to vector<128x1xf32>
    %cst_2 = arith.constant 1.280000e+02 : f32
    %4 = vector.broadcast %cst_2 : f32 to vector<128x1xf32>
    %5 = arith.divf %3, %4 : vector<128x1xf32>
    %6 = arith.mulf %1, %1 : vector<128x128xf32>
    %cst_3 = arith.constant dense<0.000000e+00> : vector<128xf32>
    %7 = vector.multi_reduction <add>, %6, %cst_3 [1] : vector<128x128xf32> to vector<128xf32>
    %8 = vector.shape_cast %7 : vector<128xf32> to vector<128x1xf32>
    %cst_4 = arith.constant 1.280000e+02 : f32
    %9 = vector.broadcast %cst_4 : f32 to vector<128x1xf32>
    %10 = arith.divf %8, %9 : vector<128x1xf32>
    %11 = arith.mulf %5, %5 : vector<128x1xf32>
    %12 = arith.subf %10, %11 : vector<128x1xf32>
    %cst_5 = arith.constant 0.000000e+00 : f32
    %13 = vector.broadcast %cst_5 : f32 to vector<128x1xf32>
    %14 = arith.maximumf %12, %13 : vector<128x1xf32>
    %cst_6 = arith.constant 9.99999974E-6 : f32
    %15 = vector.broadcast %cst_6 : f32 to vector<128x1xf32>
    %16 = arith.addf %14, %15 : vector<128x1xf32>
    %17 = math.rsqrt %16 : vector<128x1xf32>
    %18 = vector.broadcast %5 : vector<128x1xf32> to vector<128x128xf32>
    %19 = arith.subf %1, %18 : vector<128x128xf32>
    %20 = vector.broadcast %17 : vector<128x1xf32> to vector<128x128xf32>
    %21 = arith.mulf %19, %20 : vector<128x128xf32>
    %c0_7 = arith.constant 0 : index
    %c0_8 = arith.constant 0 : index
    %22 = vector.load %arg2[%c0_7, %c0_8] : memref<1x128xf32, #tpu.memory_space<vmem>>, vector<1x128xf32>
    %23 = vector.broadcast %22 : vector<1x128xf32> to vector<128x128xf32>
    %24 = arith.mulf %21, %23 : vector<128x128xf32>
    %c0_9 = arith.constant 0 : index
    %c0_10 = arith.constant 0 : index
    %25 = vector.load %arg3[%c0_9, %c0_10] : memref<1x128xf32, #tpu.memory_space<vmem>>, vector<1x128xf32>
    %26 = vector.broadcast %25 : vector<1x128xf32> to vector<128x128xf32>
    %27 = arith.addf %24, %26 : vector<128x128xf32>
    %28 = arith.truncf %27 : vector<128x128xf32> to vector<128x128xbf16>
    %c0_11 = arith.constant 0 : index
    %c0_12 = arith.constant 0 : index
    %29 = vector.load %arg6[%c0_11, %c0_12] : memref<128x128xbf16, #tpu.memory_space<vmem>>, vector<128x128xbf16>
    %cst_13 = arith.constant dense<0.000000e+00> : vector<128x128xf32>
    %30 = tpu.matmul %28, %29, %cst_13 {dimension_numbers = #tpu.dot_dimension_numbers<[1], [0], [0], [1], [0, 0, 1, 1], [], []>} : vector<128x128xbf16>, vector<128x128xbf16>, vector<128x128xf32> -> vector<128x128xf32>
    %c0_14 = arith.constant 0 : index
    %c0_15 = arith.constant 0 : index
    %31 = vector.load %arg7[%c0_14, %c0_15] : memref<1x128xf32, #tpu.memory_space<vmem>>, vector<1x128xf32>
    %32 = vector.broadcast %31 : vector<1x128xf32> to vector<128x128xf32>
    %33 = arith.addf %30, %32 : vector<128x128xf32>
    %cst_16 = arith.constant 5.000000e-01 : f32
    %34 = vector.broadcast %cst_16 : f32 to vector<128x128xf32>
    %35 = arith.mulf %34, %33 : vector<128x128xf32>
    %cst_17 = arith.constant 0.707106769 : f32
    %36 = vector.broadcast %cst_17 : f32 to vector<128x128xf32>
    %37 = arith.mulf %33, %36 : vector<128x128xf32>
    %38 = math.erf %37 : vector<128x128xf32>
    %cst_18 = arith.constant 1.000000e+00 : f32
    %39 = vector.broadcast %cst_18 : f32 to vector<128x128xf32>
    %40 = arith.addf %39, %38 : vector<128x128xf32>
    %41 = arith.mulf %35, %40 : vector<128x128xf32>
    %c0_19 = arith.constant 0 : index
    %c0_20 = arith.constant 0 : index
    %42 = vector.load %arg8[%c0_19, %c0_20] : memref<1x128xf32, #tpu.memory_space<vmem>>, vector<1x128xf32>
    %c0_21 = arith.constant 0 : index
    %c0_22 = arith.constant 0 : index
    %43 = vector.load %arg9[%c0_21, %c0_22] : memref<1x128xf32, #tpu.memory_space<vmem>>, vector<1x128xf32>
    %cst_23 = arith.constant dense<0.000000e+00> : vector<128xf32>
    %44 = vector.multi_reduction <add>, %41, %cst_23 [1] : vector<128x128xf32> to vector<128xf32>
    %45 = vector.shape_cast %44 : vector<128xf32> to vector<128x1xf32>
    %cst_24 = arith.constant 1.280000e+02 : f32
    %46 = vector.broadcast %cst_24 : f32 to vector<128x1xf32>
    %47 = arith.divf %45, %46 : vector<128x1xf32>
    %48 = arith.mulf %41, %41 : vector<128x128xf32>
    %cst_25 = arith.constant dense<0.000000e+00> : vector<128xf32>
    %49 = vector.multi_reduction <add>, %48, %cst_25 [1] : vector<128x128xf32> to vector<128xf32>
    %50 = vector.shape_cast %49 : vector<128xf32> to vector<128x1xf32>
    %cst_26 = arith.constant 1.280000e+02 : f32
    %51 = vector.broadcast %cst_26 : f32 to vector<128x1xf32>
    %52 = arith.divf %50, %51 : vector<128x1xf32>
    %53 = arith.mulf %47, %47 : vector<128x1xf32>
    %54 = arith.subf %52, %53 : vector<128x1xf32>
    %cst_27 = arith.constant 0.000000e+00 : f32
    %55 = vector.broadcast %cst_27 : f32 to vector<128x1xf32>
    %56 = arith.maximumf %54, %55 : vector<128x1xf32>
    %57 = vector.broadcast %47 : vector<128x1xf32> to vector<128x128xf32>
    %58 = arith.subf %41, %57 : vector<128x128xf32>
    %cst_28 = arith.constant 9.99999974E-6 : f32
    %59 = vector.broadcast %cst_28 : f32 to vector<128x1xf32>
    %60 = arith.addf %56, %59 : vector<128x1xf32>
    %61 = math.rsqrt %60 : vector<128x1xf32>
    %62 = vector.broadcast %61 : vector<128x1xf32> to vector<128x128xf32>
    %63 = arith.mulf %58, %62 : vector<128x128xf32>
    %64 = vector.broadcast %42 : vector<1x128xf32> to vector<128x128xf32>
    %65 = arith.mulf %63, %64 : vector<128x128xf32>
    %66 = vector.broadcast %43 : vector<1x128xf32> to vector<128x128xf32>
    %67 = arith.addf %65, %66 : vector<128x128xf32>
    %68 = arith.truncf %67 : vector<128x128xf32> to vector<128x128xbf16>
    %c0_29 = arith.constant 0 : index
    %c0_30 = arith.constant 0 : index
    %69 = vector.load %arg4[%c0_29, %c0_30] : memref<128x128xbf16, #tpu.memory_space<vmem>>, vector<128x128xbf16>
    %cst_31 = arith.constant dense<0.000000e+00> : vector<128x128xf32>
    %70 = tpu.matmul %28, %69, %cst_31 {dimension_numbers = #tpu.dot_dimension_numbers<[1], [0], [0], [1], [0, 0, 1, 1], [], []>} : vector<128x128xbf16>, vector<128x128xbf16>, vector<128x128xf32> -> vector<128x128xf32>
    %c0_32 = arith.constant 0 : index
    %c0_33 = arith.constant 0 : index
    %71 = vector.load %arg5[%c0_32, %c0_33] : memref<1x128xf32, #tpu.memory_space<vmem>>, vector<1x128xf32>
    %72 = vector.broadcast %71 : vector<1x128xf32> to vector<128x128xf32>
    %73 = arith.addf %70, %72 : vector<128x128xf32>
    %cst_34 = arith.constant 5.000000e-01 : f32
    %74 = vector.broadcast %cst_34 : f32 to vector<128x128xf32>
    %75 = arith.mulf %74, %73 : vector<128x128xf32>
    %cst_35 = arith.constant 0.707106769 : f32
    %76 = vector.broadcast %cst_35 : f32 to vector<128x128xf32>
    %77 = arith.mulf %73, %76 : vector<128x128xf32>
    %78 = math.erf %77 : vector<128x128xf32>
    %cst_36 = arith.constant 1.000000e+00 : f32
    %79 = vector.broadcast %cst_36 : f32 to vector<128x128xf32>
    %80 = arith.addf %79, %78 : vector<128x128xf32>
    %81 = arith.mulf %75, %80 : vector<128x128xf32>
    %82 = arith.truncf %81 : vector<128x128xf32> to vector<128x128xbf16>
    %83 = vector.shape_cast %82 : vector<128x128xbf16> to vector<8x16x128xbf16>
    %84 = vector.shape_cast %68 : vector<128x128xbf16> to vector<8x16x128xbf16>
    %85 = vector.extract_strided_slice %83 {offsets = [0, 0, 0], sizes = [1, 16, 128], strides = [1, 1, 1]} : vector<8x16x128xbf16> to vector<1x16x128xbf16>
    %86 = vector.shape_cast %85 : vector<1x16x128xbf16> to vector<16x128xbf16>
    %87 = vector.extract_strided_slice %83 {offsets = [1, 0, 0], sizes = [1, 16, 128], strides = [1, 1, 1]} : vector<8x16x128xbf16> to vector<1x16x128xbf16>
    %88 = vector.shape_cast %87 : vector<1x16x128xbf16> to vector<16x128xbf16>
    %89 = vector.extract_strided_slice %83 {offsets = [2, 0, 0], sizes = [1, 16, 128], strides = [1, 1, 1]} : vector<8x16x128xbf16> to vector<1x16x128xbf16>
    %90 = vector.shape_cast %89 : vector<1x16x128xbf16> to vector<16x128xbf16>
    %91 = vector.extract_strided_slice %83 {offsets = [3, 0, 0], sizes = [1, 16, 128], strides = [1, 1, 1]} : vector<8x16x128xbf16> to vector<1x16x128xbf16>
    %92 = vector.shape_cast %91 : vector<1x16x128xbf16> to vector<16x128xbf16>
    %93 = vector.extract_strided_slice %83 {offsets = [4, 0, 0], sizes = [1, 16, 128], strides = [1, 1, 1]} : vector<8x16x128xbf16> to vector<1x16x128xbf16>
    %94 = vector.shape_cast %93 : vector<1x16x128xbf16> to vector<16x128xbf16>
    %95 = vector.extract_strided_slice %83 {offsets = [5, 0, 0], sizes = [1, 16, 128], strides = [1, 1, 1]} : vector<8x16x128xbf16> to vector<1x16x128xbf16>
    %96 = vector.shape_cast %95 : vector<1x16x128xbf16> to vector<16x128xbf16>
    %97 = vector.extract_strided_slice %83 {offsets = [6, 0, 0], sizes = [1, 16, 128], strides = [1, 1, 1]} : vector<8x16x128xbf16> to vector<1x16x128xbf16>
    %98 = vector.shape_cast %97 : vector<1x16x128xbf16> to vector<16x128xbf16>
    %99 = vector.extract_strided_slice %83 {offsets = [7, 0, 0], sizes = [1, 16, 128], strides = [1, 1, 1]} : vector<8x16x128xbf16> to vector<1x16x128xbf16>
    %100 = vector.shape_cast %99 : vector<1x16x128xbf16> to vector<16x128xbf16>
    %101 = tpu.concatenate %86, %88, %90, %92, %94, %96, %98, %100 in 1 : vector<16x128xbf16>, vector<16x128xbf16>, vector<16x128xbf16>, vector<16x128xbf16>, vector<16x128xbf16>, vector<16x128xbf16>, vector<16x128xbf16>, vector<16x128xbf16> -> vector<16x1024xbf16>
    %102 = vector.extract_strided_slice %84 {offsets = [0, 0, 0], sizes = [1, 16, 128], strides = [1, 1, 1]} : vector<8x16x128xbf16> to vector<1x16x128xbf16>
    %103 = vector.shape_cast %102 : vector<1x16x128xbf16> to vector<16x128xbf16>
    %104 = vector.extract_strided_slice %84 {offsets = [1, 0, 0], sizes = [1, 16, 128], strides = [1, 1, 1]} : vector<8x16x128xbf16> to vector<1x16x128xbf16>
    %105 = vector.shape_cast %104 : vector<1x16x128xbf16> to vector<16x128xbf16>
    %106 = vector.extract_strided_slice %84 {offsets = [2, 0, 0], sizes = [1, 16, 128], strides = [1, 1, 1]} : vector<8x16x128xbf16> to vector<1x16x128xbf16>
    %107 = vector.shape_cast %106 : vector<1x16x128xbf16> to vector<16x128xbf16>
    %108 = vector.extract_strided_slice %84 {offsets = [3, 0, 0], sizes = [1, 16, 128], strides = [1, 1, 1]} : vector<8x16x128xbf16> to vector<1x16x128xbf16>
    %109 = vector.shape_cast %108 : vector<1x16x128xbf16> to vector<16x128xbf16>
    %110 = vector.extract_strided_slice %84 {offsets = [4, 0, 0], sizes = [1, 16, 128], strides = [1, 1, 1]} : vector<8x16x128xbf16> to vector<1x16x128xbf16>
    %111 = vector.shape_cast %110 : vector<1x16x128xbf16> to vector<16x128xbf16>
    %112 = vector.extract_strided_slice %84 {offsets = [5, 0, 0], sizes = [1, 16, 128], strides = [1, 1, 1]} : vector<8x16x128xbf16> to vector<1x16x128xbf16>
    %113 = vector.shape_cast %112 : vector<1x16x128xbf16> to vector<16x128xbf16>
    %114 = vector.extract_strided_slice %84 {offsets = [6, 0, 0], sizes = [1, 16, 128], strides = [1, 1, 1]} : vector<8x16x128xbf16> to vector<1x16x128xbf16>
    %115 = vector.shape_cast %114 : vector<1x16x128xbf16> to vector<16x128xbf16>
    %116 = vector.extract_strided_slice %84 {offsets = [7, 0, 0], sizes = [1, 16, 128], strides = [1, 1, 1]} : vector<8x16x128xbf16> to vector<1x16x128xbf16>
    %117 = vector.shape_cast %116 : vector<1x16x128xbf16> to vector<16x128xbf16>
    %118 = tpu.concatenate %103, %105, %107, %109, %111, %113, %115, %117 in 1 : vector<16x128xbf16>, vector<16x128xbf16>, vector<16x128xbf16>, vector<16x128xbf16>, vector<16x128xbf16>, vector<16x128xbf16>, vector<16x128xbf16>, vector<16x128xbf16> -> vector<16x1024xbf16>
    %c0_37 = arith.constant 0 : index
    %c0_38 = arith.constant 0 : index
    %119 = vector.load %arg10[%c0_37, %c0_38] : memref<16x16xbf16, #tpu.memory_space<vmem>>, vector<16x16xbf16>
    %cst_39 = arith.constant dense<0.000000e+00> : vector<16x1024xf32>
    %120 = tpu.matmul %119, %118, %cst_39 {dimension_numbers = #tpu.dot_dimension_numbers<[1], [0], [0], [1], [0, 0, 1, 1], [], []>} : vector<16x16xbf16>, vector<16x1024xbf16>, vector<16x1024xf32> -> vector<16x1024xf32>
    %c0_40 = arith.constant 0 : index
    %c0_41 = arith.constant 0 : index
    %121 = vector.load %arg11[%c0_40, %c0_41] : memref<16x1xf32, #tpu.memory_space<vmem>>, vector<16x1xf32>
    %122 = vector.broadcast %121 : vector<16x1xf32> to vector<16x1024xf32>
    %123 = arith.addf %120, %122 : vector<16x1024xf32>
    %124 = arith.truncf %123 : vector<16x1024xf32> to vector<16x1024xbf16>
    %125 = arith.mulf %101, %124 : vector<16x1024xbf16>
    %126 = vector.extract_strided_slice %125 {offsets = [0, 0], sizes = [16, 128], strides = [1, 1]} : vector<16x1024xbf16> to vector<16x128xbf16>
    %127 = vector.extract_strided_slice %125 {offsets = [0, 128], sizes = [16, 128], strides = [1, 1]} : vector<16x1024xbf16> to vector<16x128xbf16>
    %128 = vector.extract_strided_slice %125 {offsets = [0, 256], sizes = [16, 128], strides = [1, 1]} : vector<16x1024xbf16> to vector<16x128xbf16>
    %129 = vector.extract_strided_slice %125 {offsets = [0, 384], sizes = [16, 128], strides = [1, 1]} : vector<16x1024xbf16> to vector<16x128xbf16>
    %130 = vector.extract_strided_slice %125 {offsets = [0, 512], sizes = [16, 128], strides = [1, 1]} : vector<16x1024xbf16> to vector<16x128xbf16>
    %131 = vector.extract_strided_slice %125 {offsets = [0, 640], sizes = [16, 128], strides = [1, 1]} : vector<16x1024xbf16> to vector<16x128xbf16>
    %132 = vector.extract_strided_slice %125 {offsets = [0, 768], sizes = [16, 128], strides = [1, 1]} : vector<16x1024xbf16> to vector<16x128xbf16>
    %133 = vector.extract_strided_slice %125 {offsets = [0, 896], sizes = [16, 128], strides = [1, 1]} : vector<16x1024xbf16> to vector<16x128xbf16>
    %134 = tpu.concatenate %126, %127, %128, %129, %130, %131, %132, %133 in 0 : vector<16x128xbf16>, vector<16x128xbf16>, vector<16x128xbf16>, vector<16x128xbf16>, vector<16x128xbf16>, vector<16x128xbf16>, vector<16x128xbf16>, vector<16x128xbf16> -> vector<128x128xbf16>
    %c0_42 = arith.constant 0 : index
    %c0_43 = arith.constant 0 : index
    %135 = vector.load %arg12[%c0_42, %c0_43] : memref<128x128xbf16, #tpu.memory_space<vmem>>, vector<128x128xbf16>
    %cst_44 = arith.constant dense<0.000000e+00> : vector<128x128xf32>
    %136 = tpu.matmul %134, %135, %cst_44 {dimension_numbers = #tpu.dot_dimension_numbers<[1], [0], [0], [1], [0, 0, 1, 1], [], []>} : vector<128x128xbf16>, vector<128x128xbf16>, vector<128x128xf32> -> vector<128x128xf32>
    %c0_45 = arith.constant 0 : index
    %c0_46 = arith.constant 0 : index
    %137 = vector.load %arg13[%c0_45, %c0_46] : memref<1x128xf32, #tpu.memory_space<vmem>>, vector<1x128xf32>
    %138 = vector.broadcast %137 : vector<1x128xf32> to vector<128x128xf32>
    %139 = arith.addf %136, %138 : vector<128x128xf32>
    %c0_47 = arith.constant 0 : index
    %c0_48 = arith.constant 0 : index
    %140 = vector.load %arg14[%c0_47, %c0_48] : memref<1x128xf32, #tpu.memory_space<vmem>>, vector<1x128xf32>
    %c0_49 = arith.constant 0 : index
    %c0_50 = arith.constant 0 : index
    %141 = vector.load %arg15[%c0_49, %c0_50] : memref<1x128xf32, #tpu.memory_space<vmem>>, vector<1x128xf32>
    %cst_51 = arith.constant dense<0.000000e+00> : vector<128xf32>
    %142 = vector.multi_reduction <add>, %139, %cst_51 [1] : vector<128x128xf32> to vector<128xf32>
    %143 = vector.shape_cast %142 : vector<128xf32> to vector<128x1xf32>
    %cst_52 = arith.constant 1.280000e+02 : f32
    %144 = vector.broadcast %cst_52 : f32 to vector<128x1xf32>
    %145 = arith.divf %143, %144 : vector<128x1xf32>
    %146 = arith.mulf %139, %139 : vector<128x128xf32>
    %cst_53 = arith.constant dense<0.000000e+00> : vector<128xf32>
    %147 = vector.multi_reduction <add>, %146, %cst_53 [1] : vector<128x128xf32> to vector<128xf32>
    %148 = vector.shape_cast %147 : vector<128xf32> to vector<128x1xf32>
    %cst_54 = arith.constant 1.280000e+02 : f32
    %149 = vector.broadcast %cst_54 : f32 to vector<128x1xf32>
    %150 = arith.divf %148, %149 : vector<128x1xf32>
    %151 = arith.mulf %145, %145 : vector<128x1xf32>
    %152 = arith.subf %150, %151 : vector<128x1xf32>
    %cst_55 = arith.constant 0.000000e+00 : f32
    %153 = vector.broadcast %cst_55 : f32 to vector<128x1xf32>
    %154 = arith.maximumf %152, %153 : vector<128x1xf32>
    %155 = vector.broadcast %145 : vector<128x1xf32> to vector<128x128xf32>
    %156 = arith.subf %139, %155 : vector<128x128xf32>
    %cst_56 = arith.constant 9.99999974E-6 : f32
    %157 = vector.broadcast %cst_56 : f32 to vector<128x1xf32>
    %158 = arith.addf %154, %157 : vector<128x1xf32>
    %159 = math.rsqrt %158 : vector<128x1xf32>
    %160 = vector.broadcast %159 : vector<128x1xf32> to vector<128x128xf32>
    %161 = arith.mulf %156, %160 : vector<128x128xf32>
    %162 = vector.broadcast %140 : vector<1x128xf32> to vector<128x128xf32>
    %163 = arith.mulf %161, %162 : vector<128x128xf32>
    %164 = vector.broadcast %141 : vector<1x128xf32> to vector<128x128xf32>
    %165 = arith.addf %163, %164 : vector<128x128xf32>
    %cst_57 = arith.constant 5.000000e-01 : f32
    %166 = vector.broadcast %cst_57 : f32 to vector<128x128xf32>
    %167 = arith.mulf %166, %165 : vector<128x128xf32>
    %cst_58 = arith.constant 0.707106769 : f32
    %168 = vector.broadcast %cst_58 : f32 to vector<128x128xf32>
    %169 = arith.mulf %165, %168 : vector<128x128xf32>
    %170 = math.erf %169 : vector<128x128xf32>
    %cst_59 = arith.constant 1.000000e+00 : f32
    %171 = vector.broadcast %cst_59 : f32 to vector<128x128xf32>
    %172 = arith.addf %171, %170 : vector<128x128xf32>
    %173 = arith.mulf %167, %172 : vector<128x128xf32>
    %c0_60 = arith.constant 0 : index
    %c0_61 = arith.constant 0 : index
    %c0_62 = arith.constant 0 : index
    %174 = vector.load %arg1[%c0_60, %c0_61, %c0_62] : memref<8x16x128xf32, #tpu.memory_space<vmem>>, vector<8x16x128xf32>
    %175 = vector.shape_cast %174 : vector<8x16x128xf32> to vector<128x128xf32>
    %176 = vector.broadcast %5 : vector<128x1xf32> to vector<128x128xf32>
    %177 = arith.subf %175, %176 : vector<128x128xf32>
    %178 = vector.broadcast %17 : vector<128x1xf32> to vector<128x128xf32>
    %179 = arith.mulf %177, %178 : vector<128x128xf32>
    %c0_63 = arith.constant 0 : index
    %c0_64 = arith.constant 0 : index
    %180 = vector.load %arg2[%c0_63, %c0_64] : memref<1x128xf32, #tpu.memory_space<vmem>>, vector<1x128xf32>
    %181 = vector.broadcast %180 : vector<1x128xf32> to vector<128x128xf32>
    %182 = arith.mulf %179, %181 : vector<128x128xf32>
    %c0_65 = arith.constant 0 : index
    %c0_66 = arith.constant 0 : index
    %183 = vector.load %arg3[%c0_65, %c0_66] : memref<1x128xf32, #tpu.memory_space<vmem>>, vector<1x128xf32>
    %184 = vector.broadcast %183 : vector<1x128xf32> to vector<128x128xf32>
    %185 = arith.addf %182, %184 : vector<128x128xf32>
    %186 = arith.addf %185, %173 : vector<128x128xf32>
    %cst_67 = arith.constant 5.000000e-01 : f32
    %187 = vector.broadcast %cst_67 : f32 to vector<128x128xf32>
    %188 = arith.mulf %186, %187 : vector<128x128xf32>
    %189 = vector.shape_cast %188 : vector<128x128xf32> to vector<8x16x128xf32>
    %c0_68 = arith.constant 0 : index
    %c0_69 = arith.constant 0 : index
    %c0_70 = arith.constant 0 : index
    %190 = vector.load %arg16[%c0_68, %c0_69, %c0_70] : memref<8x16x128xf32, #tpu.memory_space<vmem>>, vector<8x16x128xf32>
    tpu.vector_store %arg16[%c0_68, %c0_69, %c0_70], %189 {strides = array<i32>} : memref<8x16x128xf32, #tpu.memory_space<vmem>>, vector<8x16x128xf32>,
    return
  }
  func.func @transform_0(%arg0: i32) -> (i32, i32, i32) {
    %c0_i32 = arith.constant 0 : i32
    %c0_i32_0 = arith.constant 0 : i32
    %c0_i32_1 = arith.constant 0 : i32
    return %arg0, %c0_i32, %c0_i32_0 : i32, i32, i32
  }
  func.func @transform_1(%arg0: i32) -> (i32, i32) {
    %c0_i32 = arith.constant 0 : i32
    %c0_i32_0 = arith.constant 0 : i32
    %c0_i32_1 = arith.constant 0 : i32
    return %c0_i32, %c0_i32_0 : i32, i32
  }
  func.func @transform_2(%arg0: i32) -> (i32, i32) {
    %c0_i32 = arith.constant 0 : i32
    %c0_i32_0 = arith.constant 0 : i32
    %c0_i32_1 = arith.constant 0 : i32
    return %c0_i32, %c0_i32_0 : i32, i32
  }
  func.func @transform_3(%arg0: i32) -> (i32, i32) {
    %c0_i32 = arith.constant 0 : i32
    %c0_i32_0 = arith.constant 0 : i32
    %c0_i32_1 = arith.constant 0 : i32
    return %c0_i32, %c0_i32_0 : i32, i32
  }
  func.func @transform_4(%arg0: i32) -> (i32, i32) {
    %c0_i32 = arith.constant 0 : i32
    %c0_i32_0 = arith.constant 0 : i32
    %c0_i32_1 = arith.constant 0 : i32
    return %c0_i32, %c0_i32_0 : i32, i32
  }
  func.func @transform_5(%arg0: i32) -> (i32, i32) {
    %c0_i32 = arith.constant 0 : i32
    %c0_i32_0 = arith.constant 0 : i32
    %c0_i32_1 = arith.constant 0 : i32
    return %c0_i32, %c0_i32_0 : i32, i32
  }
  func.func @transform_6(%arg0: i32) -> (i32, i32) {
    %c0_i32 = arith.constant 0 : i32
    %c0_i32_0 = arith.constant 0 : i32
    %c0_i32_1 = arith.constant 0 : i32
    return %c0_i32, %c0_i32_0 : i32, i32
  }
  func.func @transform_7(%arg0: i32) -> (i32, i32) {
    %c0_i32 = arith.constant 0 : i32
    %c0_i32_0 = arith.constant 0 : i32
    %c0_i32_1 = arith.constant 0 : i32
    return %c0_i32, %c0_i32_0 : i32, i32
  }
  func.func @transform_8(%arg0: i32) -> (i32, i32) {
    %c0_i32 = arith.constant 0 : i32
    %c0_i32_0 = arith.constant 0 : i32
    %c0_i32_1 = arith.constant 0 : i32
    return %c0_i32, %c0_i32_0 : i32, i32
  }
  func.func @transform_9(%arg0: i32) -> (i32, i32) {
    %c0_i32 = arith.constant 0 : i32
    %c0_i32_0 = arith.constant 0 : i32
    %c0_i32_1 = arith.constant 0 : i32
    return %c0_i32, %c0_i32_0 : i32, i32
  }
  func.func @transform_10(%arg0: i32) -> (i32, i32) {
    %c0_i32 = arith.constant 0 : i32
    %c0_i32_0 = arith.constant 0 : i32
    %c0_i32_1 = arith.constant 0 : i32
    return %c0_i32, %c0_i32_0 : i32, i32
  }
  func.func @transform_11(%arg0: i32) -> (i32, i32) {
    %c0_i32 = arith.constant 0 : i32
    %c0_i32_0 = arith.constant 0 : i32
    %c0_i32_1 = arith.constant 0 : i32
    return %c0_i32, %c0_i32_0 : i32, i32
  }
  func.func @transform_12(%arg0: i32) -> (i32, i32) {
    %c0_i32 = arith.constant 0 : i32
    %c0_i32_0 = arith.constant 0 : i32
    %c0_i32_1 = arith.constant 0 : i32
    return %c0_i32, %c0_i32_0 : i32, i32
  }
  func.func @transform_13(%arg0: i32) -> (i32, i32) {
    %c0_i32 = arith.constant 0 : i32
    %c0_i32_0 = arith.constant 0 : i32
    %c0_i32_1 = arith.constant 0 : i32
    return %c0_i32, %c0_i32_0 : i32, i32
  }
  func.func @transform_14(%arg0: i32) -> (i32, i32) {
    %c0_i32 = arith.constant 0 : i32
    %c0_i32_0 = arith.constant 0 : i32
    %c0_i32_1 = arith.constant 0 : i32
    return %c0_i32, %c0_i32_0 : i32, i32
  }
  func.func @transform_15(%arg0: i32) -> (i32, i32, i32) {
    %c0_i32 = arith.constant 0 : i32
    %c0_i32_0 = arith.constant 0 : i32
    %c0_i32_1 = arith.constant 0 : i32
    return %arg0, %c0_i32, %c0_i32_0 : i32, i32, i32
  }
}

</mosaic_0001>

<llo_original>
// kernel: tpu_custom_call.1
$region0: #{tpu_custom_call.1}
  #allocation0 [shape = 'u32[]', space=smem, size = 0x4, offset = 0x4, fixed_abs, tag = 'smem constant byte address 0x4 - core index']
  #allocation1 [shape = 'u32[144,128]{1,0:T(1,128)}', space=vmem, size = 0x12000, scoped, tag = 'internal scratch']
  %s0 = inlined_call_operand.hbm [shape: f32[16,16,128], index: 0, kind: input, shape index: {}]
  %s1 = inlined_call_operand.vmem [shape: f32[1,128], index: 1, kind: input, shape index: {}]
  %s2 = inlined_call_operand.vmem [shape: f32[1,128], index: 2, kind: input, shape index: {}]
  %s3 = inlined_call_operand.hbm [shape: bf16[128,128], index: 3, kind: input, shape index: {}]
  %s4 = inlined_call_operand.vmem [shape: f32[1,128], index: 4, kind: input, shape index: {}]
  %s5 = inlined_call_operand.hbm [shape: bf16[128,128], index: 5, kind: input, shape index: {}]
  %s6 = inlined_call_operand.vmem [shape: f32[1,128], index: 6, kind: input, shape index: {}]
  %s7 = inlined_call_operand.vmem [shape: f32[1,128], index: 7, kind: input, shape index: {}]
  %s8 = inlined_call_operand.vmem [shape: f32[1,128], index: 8, kind: input, shape index: {}]
  %s9 = inlined_call_operand.vmem [shape: bf16[16,16], index: 9, kind: input, shape index: {}]
  %s10 = inlined_call_operand.vmem [shape: f32[16,1], index: 10, kind: input, shape index: {}]
  %s11 = inlined_call_operand.hbm [shape: bf16[128,128], index: 11, kind: input, shape index: {}]
  %s12 = inlined_call_operand.vmem [shape: f32[1,128], index: 12, kind: input, shape index: {}]
  %s13 = inlined_call_operand.vmem [shape: f32[1,128], index: 13, kind: input, shape index: {}]
  %s14 = inlined_call_operand.vmem [shape: f32[1,128], index: 14, kind: input, shape index: {}]
  %s15 = inlined_call_operand.hbm [shape: f32[16,16,128], index: 15, kind: output, shape index: {}]
  %s16 = sld [smem:[#allocation0]]
  $region109: #{tpu_custom_call.1} parent=0
    _
  %s18 = ssub.s32 1, %s16
  %s19 = scalar_select 0, %s18, %s16
  $region1: #{tpu_custom_call.1} parent=0
    #allocation2 [shape = 'u8[131072]{0}', space=vmem, size = 0x20000, scoped, tag = 'input window, operand 0']
    #allocation3 [shape = 's32[2]{0}', space=sflag, size = 0x8, scoped, tag = 'scoped memory for tpu_custom_call.1']
    #allocation4 [shape = 's32[2]{0}', space=sflag, size = 0x8, scoped, tag = 'scoped memory for tpu_custom_call.1']
    #allocation5 [shape = 'u8[32768]{0}', space=vmem, size = 0x8000, scoped, tag = 'input window, operand 3, single buffered']
    #allocation6 [shape = 's32[1]{0}', space=sflag, size = 0x4, scoped, tag = 'scoped memory for tpu_custom_call.1']
    #allocation7 [shape = 'u8[32768]{0}', space=vmem, size = 0x8000, scoped, tag = 'input window, operand 5, single buffered']
    #allocation8 [shape = 'u8[32768]{0}', space=vmem, size = 0x8000, scoped, tag = 'input window, operand 11, single buffered']
    #allocation9 [shape = 's32[1]{0}', space=sflag, size = 0x4, scoped, tag = 'scoped memory for tpu_custom_call.1']
    #allocation10 [shape = 'u8[131072]{0}', space=vmem, size = 0x20000, scoped, tag = 'output window, operand 0']
    %20 = vsyncpa [#allocation3], 0
    %s21 = scalar_lea.sflag [#allocation3], 1
    %22 = vsyncpa %s21, 0
    %23 = vsyncpa [#allocation6], 0
    %24 = vsyncpa [#allocation9], 0
    %25 = vsyncpa [#allocation4], 0
    %s26 = scalar_lea.sflag [#allocation4], 1
    %27 = vsyncpa %s26, 0
    loop: start=0, step=1, limit=4
    $region2: #{tpu_custom_call.1} parent=1 // loop_pre_header
      _
    $region3: #{tpu_custom_call.1} parent=1 // loop_header
      %s29 = sphi 0, %s33
      %p30 = scmp.ge.s32.totalorder %s29, 4
      %s39 = sphi 0, %s41
      %s42 = sphi 0, %s39
      %s43 = sphi 0, %s42
      %s59 = sphi 0, %s43
      %s63 = sphi 0, %s63
      %s65 = sphi 0, %s63
      %s66 = sphi 0, %s65
      %s80 = sphi 0, %s66
      %s84 = sphi 0, %s84
      %s86 = sphi 0, %s84
      %s87 = sphi 0, %s86
      %s101 = sphi 0, %s87
      %s105 = sphi 0, %s105
      %s107 = sphi 0, %s105
      %s108 = sphi 0, %s107
      %s122 = sphi 0, %s108
      %s126 = sphi 0, %s126
      %s128 = sphi 0, %s126
      %s129 = sphi 0, %s128
      %s143 = sphi 0, %s129
      %s147 = sphi 0, %s147
      %s149 = sphi 0, %s147
      %s150 = sphi 0, %s149
      %s164 = sphi 0, %s150
      %s168 = sphi 0, %s168
      %s170 = sphi 0, %s168
      %s171 = sphi 0, %s170
      %s185 = sphi 0, %s171
      %s189 = sphi 0, %s189
      %s191 = sphi 0, %s189
      %s192 = sphi 0, %s191
      %s206 = sphi 0, %s192
      %s210 = sphi 0, %s210
      %s212 = sphi 0, %s210
      %s213 = sphi 0, %s212
      %s227 = sphi 0, %s213
      %s231 = sphi 0, %s231
      %s233 = sphi 0, %s231
      %s234 = sphi 0, %s233
      %s248 = sphi 0, %s234
      %s252 = sphi 0, %s252
      %s254 = sphi 0, %s252
      %s255 = sphi 0, %s254
      %s269 = sphi 0, %s255
      %s273 = sphi 0, %s273
      %s275 = sphi 0, %s273
      %s276 = sphi 0, %s275
      %s290 = sphi 0, %s276
      %s294 = sphi 0, %s294
      %s296 = sphi 0, %s294
      %s297 = sphi 0, %s296
      %s311 = sphi 0, %s297
      %s315 = sphi 0, %s315
      %s317 = sphi 0, %s315
      %s318 = sphi 0, %s317
      %s332 = sphi 0, %s318
      %s336 = sphi 0, %s336
      %s338 = sphi 0, %s336
      %s339 = sphi 0, %s338
      %s353 = sphi 0, %s339
      %s359 = sphi 0, %s361
      %s362 = sphi 0, %s359
      %s363 = sphi 0, %s362
      %s379 = sphi 0, %s363
    $region4: #{tpu_custom_call.1} parent=1 // loop_header_branch
      %32 = sbr.rel (%p30) target = $region8
    $region5: #{tpu_custom_call.1} parent=1 // loop_body
      %s34 = ssub.s32 %s29, 1
      %s35 = ssub.s32 %s29, 2
      %s36 = sadd.s32 %s29, 1
      %s37 = ssub.s32 %s29, %s36
      %p38 = scmp.eq.s32.totalorder %s37, 0
      %s40 = sadd.s32 %s39, 1
      %s41 = scalar_select %p38, %s39, %s40
      %p44 = pneg %p38
      %p45 = scmp.eq.s32.totalorder %s29, 1
      %p46 = por %p44, %p45
      %p47 = scmp.ne.s32.totalorder %s39, %s42
      %p48 = scmp.eq.s32.totalorder %s29, 0
      %p49 = por %p47, %p48
      %p50 = scmp.ne.s32.totalorder %s39, %s42
      %p51 = scmp.eq.s32.totalorder %s34, 1
      %p52 = por %p50, %p51
      %p53 = scmp.ne.s32.totalorder %s42, %s43
      %p54 = scmp.eq.s32.totalorder %s34, 0
      %p55 = por %p53, %p54
      %p56 = scmp.ne.s32.totalorder %s42, %s43
      %p57 = scmp.eq.s32.totalorder %s35, 1
      %p58 = por %p56, %p57
      %p60 = scmp.ne.s32.totalorder %s43, %s59
      %p61 = scmp.eq.s32.totalorder %s35, 0
      %p62 = por %p60, %p61
      %s64 = sadd.s32 %s63, 1
      %p67 = scmp.eq.s32.totalorder %s29, 1
      %p68 = scmp.ne.s32.totalorder %s63, %s65
      %p69 = scmp.eq.s32.totalorder %s29, 0
      %p70 = por %p68, %p69
      %p71 = scmp.ne.s32.totalorder %s63, %s65
      %p72 = scmp.eq.s32.totalorder %s34, 1
      %p73 = por %p71, %p72
      %p74 = scmp.ne.s32.totalorder %s65, %s66
      %p75 = scmp.eq.s32.totalorder %s34, 0
      %p76 = por %p74, %p75
      %p77 = scmp.ne.s32.totalorder %s65, %s66
      %p78 = scmp.eq.s32.totalorder %s35, 1
      %p79 = por %p77, %p78
      %p81 = scmp.ne.s32.totalorder %s66, %s80
      %p82 = scmp.eq.s32.totalorder %s35, 0
      %p83 = por %p81, %p82
      %s85 = sadd.s32 %s84, 1
      %p88 = scmp.eq.s32.totalorder %s29, 1
      %p89 = scmp.ne.s32.totalorder %s84, %s86
      %p90 = scmp.eq.s32.totalorder %s29, 0
      %p91 = por %p89, %p90
      %p92 = scmp.ne.s32.totalorder %s84, %s86
      %p93 = scmp.eq.s32.totalorder %s34, 1
      %p94 = por %p92, %p93
      %p95 = scmp.ne.s32.totalorder %s86, %s87
      %p96 = scmp.eq.s32.totalorder %s34, 0
      %p97 = por %p95, %p96
      %p98 = scmp.ne.s32.totalorder %s86, %s87
      %p99 = scmp.eq.s32.totalorder %s35, 1
      %p100 = por %p98, %p99
      %p102 = scmp.ne.s32.totalorder %s87, %s101
      %p103 = scmp.eq.s32.totalorder %s35, 0
      %p104 = por %p102, %p103
      %s106 = sadd.s32 %s105, 1
      %p109 = scmp.eq.s32.totalorder %s29, 1
      %p110 = scmp.ne.s32.totalorder %s105, %s107
      %p111 = scmp.eq.s32.totalorder %s29, 0
      %p112 = por %p110, %p111
      %p113 = scmp.ne.s32.totalorder %s105, %s107
      %p114 = scmp.eq.s32.totalorder %s34, 1
      %p115 = por %p113, %p114
      %p116 = scmp.ne.s32.totalorder %s107, %s108
      %p117 = scmp.eq.s32.totalorder %s34, 0
      %p118 = por %p116, %p117
      %p119 = scmp.ne.s32.totalorder %s107, %s108
      %p120 = scmp.eq.s32.totalorder %s35, 1
      %p121 = por %p119, %p120
      %p123 = scmp.ne.s32.totalorder %s108, %s122
      %p124 = scmp.eq.s32.totalorder %s35, 0
      %p125 = por %p123, %p124
      %s127 = sadd.s32 %s126, 1
      %p130 = scmp.eq.s32.totalorder %s29, 1
      %p131 = scmp.ne.s32.totalorder %s126, %s128
      %p132 = scmp.eq.s32.totalorder %s29, 0
      %p133 = por %p131, %p132
      %p134 = scmp.ne.s32.totalorder %s126, %s128
      %p135 = scmp.eq.s32.totalorder %s34, 1
      %p136 = por %p134, %p135
      %p137 = scmp.ne.s32.totalorder %s128, %s129
      %p138 = scmp.eq.s32.totalorder %s34, 0
      %p139 = por %p137, %p138
      %p140 = scmp.ne.s32.totalorder %s128, %s129
      %p141 = scmp.eq.s32.totalorder %s35, 1
      %p142 = por %p140, %p141
      %p144 = scmp.ne.s32.totalorder %s129, %s143
      %p145 = scmp.eq.s32.totalorder %s35, 0
      %p146 = por %p144, %p145
      %s148 = sadd.s32 %s147, 1
      %p151 = scmp.eq.s32.totalorder %s29, 1
      %p152 = scmp.ne.s32.totalorder %s147, %s149
      %p153 = scmp.eq.s32.totalorder %s29, 0
      %p154 = por %p152, %p153
      %p155 = scmp.ne.s32.totalorder %s147, %s149
      %p156 = scmp.eq.s32.totalorder %s34, 1
      %p157 = por %p155, %p156
      %p158 = scmp.ne.s32.totalorder %s149, %s150
      %p159 = scmp.eq.s32.totalorder %s34, 0
      %p160 = por %p158, %p159
      %p161 = scmp.ne.s32.totalorder %s149, %s150
      %p162 = scmp.eq.s32.totalorder %s35, 1
      %p163 = por %p161, %p162
      %p165 = scmp.ne.s32.totalorder %s150, %s164
      %p166 = scmp.eq.s32.totalorder %s35, 0
      %p167 = por %p165, %p166
      %s169 = sadd.s32 %s168, 1
      %p172 = scmp.eq.s32.totalorder %s29, 1
      %p173 = scmp.ne.s32.totalorder %s168, %s170
      %p174 = scmp.eq.s32.totalorder %s29, 0
      %p175 = por %p173, %p174
      %p176 = scmp.ne.s32.totalorder %s168, %s170
      %p177 = scmp.eq.s32.totalorder %s34, 1
      %p178 = por %p176, %p177
      %p179 = scmp.ne.s32.totalorder %s170, %s171
      %p180 = scmp.eq.s32.totalorder %s34, 0
      %p181 = por %p179, %p180
      %p182 = scmp.ne.s32.totalorder %s170, %s171
      %p183 = scmp.eq.s32.totalorder %s35, 1
      %p184 = por %p182, %p183
      %p186 = scmp.ne.s32.totalorder %s171, %s185
      %p187 = scmp.eq.s32.totalorder %s35, 0
      %p188 = por %p186, %p187
      %s190 = sadd.s32 %s189, 1
      %p193 = scmp.eq.s32.totalorder %s29, 1
      %p194 = scmp.ne.s32.totalorder %s189, %s191
      %p195 = scmp.eq.s32.totalorder %s29, 0
      %p196 = por %p194, %p195
      %p197 = scmp.ne.s32.totalorder %s189, %s191
      %p198 = scmp.eq.s32.totalorder %s34, 1
      %p199 = por %p197, %p198
      %p200 = scmp.ne.s32.totalorder %s191, %s192
      %p201 = scmp.eq.s32.totalorder %s34, 0
      %p202 = por %p200, %p201
      %p203 = scmp.ne.s32.totalorder %s191, %s192
      %p204 = scmp.eq.s32.totalorder %s35, 1
      %p205 = por %p203, %p204
      %p207 = scmp.ne.s32.totalorder %s192, %s206
      %p208 = scmp.eq.s32.totalorder %s35, 0
      %p209 = por %p207, %p208
      %s211 = sadd.s32 %s210, 1
      %p214 = scmp.eq.s32.totalorder %s29, 1
      %p215 = scmp.ne.s32.totalorder %s210, %s212
      %p216 = scmp.eq.s32.totalorder %s29, 0
      %p217 = por %p215, %p216
      %p218 = scmp.ne.s32.totalorder %s210, %s212
      %p219 = scmp.eq.s32.totalorder %s34, 1
      %p220 = por %p218, %p219
      %p221 = scmp.ne.s32.totalorder %s212, %s213
      %p222 = scmp.eq.s32.totalorder %s34, 0
      %p223 = por %p221, %p222
      %p224 = scmp.ne.s32.totalorder %s212, %s213
      %p225 = scmp.eq.s32.totalorder %s35, 1
      %p226 = por %p224, %p225
      %p228 = scmp.ne.s32.totalorder %s213, %s227
      %p229 = scmp.eq.s32.totalorder %s35, 0
      %p230 = por %p228, %p229
      %s232 = sadd.s32 %s231, 1
      %p235 = scmp.eq.s32.totalorder %s29, 1
      %p236 = scmp.ne.s32.totalorder %s231, %s233
      %p237 = scmp.eq.s32.totalorder %s29, 0
      %p238 = por %p236, %p237
      %p239 = scmp.ne.s32.totalorder %s231, %s233
      %p240 = scmp.eq.s32.totalorder %s34, 1
      %p241 = por %p239, %p240
      %p242 = scmp.ne.s32.totalorder %s233, %s234
      %p243 = scmp.eq.s32.totalorder %s34, 0
      %p244 = por %p242, %p243
      %p245 = scmp.ne.s32.totalorder %s233, %s234
      %p246 = scmp.eq.s32.totalorder %s35, 1
      %p247 = por %p245, %p246
      %p249 = scmp.ne.s32.totalorder %s234, %s248
      %p250 = scmp.eq.s32.totalorder %s35, 0
      %p251 = por %p249, %p250
      %s253 = sadd.s32 %s252, 1
      %p256 = scmp.eq.s32.totalorder %s29, 1
      %p257 = scmp.ne.s32.totalorder %s252, %s254
      %p258 = scmp.eq.s32.totalorder %s29, 0
      %p259 = por %p257, %p258
      %p260 = scmp.ne.s32.totalorder %s252, %s254
      %p261 = scmp.eq.s32.totalorder %s34, 1
      %p262 = por %p260, %p261
      %p263 = scmp.ne.s32.totalorder %s254, %s255
      %p264 = scmp.eq.s32.totalorder %s34, 0
      %p265 = por %p263, %p264
      %p266 = scmp.ne.s32.totalorder %s254, %s255
      %p267 = scmp.eq.s32.totalorder %s35, 1
      %p268 = por %p266, %p267
      %p270 = scmp.ne.s32.totalorder %s255, %s269
      %p271 = scmp.eq.s32.totalorder %s35, 0
      %p272 = por %p270, %p271
      %s274 = sadd.s32 %s273, 1
      %p277 = scmp.eq.s32.totalorder %s29, 1
      %p278 = scmp.ne.s32.totalorder %s273, %s275
      %p279 = scmp.eq.s32.totalorder %s29, 0
      %p280 = por %p278, %p279
      %p281 = scmp.ne.s32.totalorder %s273, %s275
      %p282 = scmp.eq.s32.totalorder %s34, 1
      %p283 = por %p281, %p282
      %p284 = scmp.ne.s32.totalorder %s275, %s276
      %p285 = scmp.eq.s32.totalorder %s34, 0
      %p286 = por %p284, %p285
      %p287 = scmp.ne.s32.totalorder %s275, %s276
      %p288 = scmp.eq.s32.totalorder %s35, 1
      %p289 = por %p287, %p288
      %p291 = scmp.ne.s32.totalorder %s276, %s290
      %p292 = scmp.eq.s32.totalorder %s35, 0
      %p293 = por %p291, %p292
      %s295 = sadd.s32 %s294, 1
      %p298 = scmp.eq.s32.totalorder %s29, 1
      %p299 = scmp.ne.s32.totalorder %s294, %s296
      %p300 = scmp.eq.s32.totalorder %s29, 0
      %p301 = por %p299, %p300
      %p302 = scmp.ne.s32.totalorder %s294, %s296
      %p303 = scmp.eq.s32.totalorder %s34, 1
      %p304 = por %p302, %p303
      %p305 = scmp.ne.s32.totalorder %s296, %s297
      %p306 = scmp.eq.s32.totalorder %s34, 0
      %p307 = por %p305, %p306
      %p308 = scmp.ne.s32.totalorder %s296, %s297
      %p309 = scmp.eq.s32.totalorder %s35, 1
      %p310 = por %p308, %p309
      %p312 = scmp.ne.s32.totalorder %s297, %s311
      %p313 = scmp.eq.s32.totalorder %s35, 0
      %p314 = por %p312, %p313
      %s316 = sadd.s32 %s315, 1
      %p319 = scmp.eq.s32.totalorder %s29, 1
      %p320 = scmp.ne.s32.totalorder %s315, %s317
      %p321 = scmp.eq.s32.totalorder %s29, 0
      %p322 = por %p320, %p321
      %p323 = scmp.ne.s32.totalorder %s315, %s317
      %p324 = scmp.eq.s32.totalorder %s34, 1
      %p325 = por %p323, %p324
      %p326 = scmp.ne.s32.totalorder %s317, %s318
      %p327 = scmp.eq.s32.totalorder %s34, 0
      %p328 = por %p326, %p327
      %p329 = scmp.ne.s32.totalorder %s317, %s318
      %p330 = scmp.eq.s32.totalorder %s35, 1
      %p331 = por %p329, %p330
      %p333 = scmp.ne.s32.totalorder %s318, %s332
      %p334 = scmp.eq.s32.totalorder %s35, 0
      %p335 = por %p333, %p334
      %s337 = sadd.s32 %s336, 1
      %p340 = scmp.eq.s32.totalorder %s29, 1
      %p341 = scmp.ne.s32.totalorder %s336, %s338
      %p342 = scmp.eq.s32.totalorder %s29, 0
      %p343 = por %p341, %p342
      %p344 = scmp.ne.s32.totalorder %s336, %s338
      %p345 = scmp.eq.s32.totalorder %s34, 1
      %p346 = por %p344, %p345
      %p347 = scmp.ne.s32.totalorder %s338, %s339
      %p348 = scmp.eq.s32.totalorder %s34, 0
      %p349 = por %p347, %p348
      %p350 = scmp.ne.s32.totalorder %s338, %s339
      %p351 = scmp.eq.s32.totalorder %s35, 1
      %p352 = por %p350, %p351
      %p354 = scmp.ne.s32.totalorder %s339, %s353
      %p355 = scmp.eq.s32.totalorder %s35, 0
      %p356 = por %p354, %p355
      %s357 = ssub.s32 %s29, %s36
      %p358 = scmp.eq.s32.totalorder %s357, 0
      %s360 = sadd.s32 %s359, 1
      %s361 = scalar_select %p358, %s359, %s360
      %p364 = pneg %p358
      %p365 = scmp.eq.s32.totalorder %s29, 1
      %p366 = por %p364, %p365
      %p367 = scmp.ne.s32.totalorder %s359, %s362
      %p368 = scmp.eq.s32.totalorder %s29, 0
      %p369 = por %p367, %p368
      %p370 = scmp.ne.s32.totalorder %s359, %s362
      %p371 = scmp.eq.s32.totalorder %s34, 1
      %p372 = por %p370, %p371
      %p373 = scmp.ne.s32.totalorder %s362, %s363
      %p374 = scmp.eq.s32.totalorder %s34, 0
      %p375 = por %p373, %p374
      %p376 = scmp.ne.s32.totalorder %s362, %s363
      %p377 = scmp.eq.s32.totalorder %s35, 1
      %p378 = por %p376, %p377
      %p380 = scmp.ne.s32.totalorder %s363, %s379
      %p381 = scmp.eq.s32.totalorder %s35, 0
      %p382 = por %p380, %p381
      %p383 = scmp.le.s32.totalorder 1, %s29
      %p384 = scmp.lt.s32.totalorder %s29, 3
      %p385 = pnand %p383, %p384
      %p386 = pneg %p385
      // Predicated region
      $region9: #{tpu_custom_call.1} parent=5 // pred_check
        _
      $region10: #{tpu_custom_call.1} parent=5 // pred_check_branch
        %388 = sbr.rel (%p385) target = $region12
      $region11: #{tpu_custom_call.1} parent=5 // pred_region
        %s389 = ssub.s32 %s29, 1
        // Predicated region
        $region13: #{tpu_custom_call.1} parent=11 // pred_check
          %p390 = pneg %p76
        $region14: #{tpu_custom_call.1} parent=11 // pred_check_branch
          %392 = sbr.rel (%p390) target = $region16
        $region15: #{tpu_custom_call.1} parent=11 // pred_region
          _
        $region16: #{tpu_custom_call.1} parent=11 // pred_fallthru
          _
        // Predicated region
        $region17: #{tpu_custom_call.1} parent=11 // pred_check
          %p393 = pneg %p97
        $region18: #{tpu_custom_call.1} parent=11 // pred_check_branch
          %395 = sbr.rel (%p393) target = $region20
        $region19: #{tpu_custom_call.1} parent=11 // pred_region
          _
        $region20: #{tpu_custom_call.1} parent=11 // pred_fallthru
          _
        // Predicated region
        $region21: #{tpu_custom_call.1} parent=11 // pred_check
          %p396 = pneg %p118
        $region22: #{tpu_custom_call.1} parent=11 // pred_check_branch
          %398 = sbr.rel (%p396) target = $region24
        $region23: #{tpu_custom_call.1} parent=11 // pred_region
          %s400 = ssub.s32 1024, 1024
          %401 = vsyncadd [#allocation6], %s400
          %s402 = sshll.u32 [#allocation5], 4
          %s403 = int_to_ptr.vmem [resolvable:$true] %s402
          %408 = dma.hbm_to_vmem [thread:$0]  %s3, 1024, %s403, [#allocation6], 64, 64, 4
        $region24: #{tpu_custom_call.1} parent=11 // pred_fallthru
          _
        // Predicated region
        $region25: #{tpu_custom_call.1} parent=11 // pred_check
          %p409 = pneg %p139
        $region26: #{tpu_custom_call.1} parent=11 // pred_check_branch
          %411 = sbr.rel (%p409) target = $region28
        $region27: #{tpu_custom_call.1} parent=11 // pred_region
          _
        $region28: #{tpu_custom_call.1} parent=11 // pred_fallthru
          _
        // Predicated region
        $region29: #{tpu_custom_call.1} parent=11 // pred_check
          %p412 = pneg %p160
        $region30: #{tpu_custom_call.1} parent=11 // pred_check_branch
          %414 = sbr.rel (%p412) target = $region32
        $region31: #{tpu_custom_call.1} parent=11 // pred_region
          %s416 = ssub.s32 1024, 1024
          %417 = vsyncadd [#allocation6], %s416
          %s418 = sshll.u32 [#allocation7], 4
          %s419 = int_to_ptr.vmem [resolvable:$true] %s418
          %424 = dma.hbm_to_vmem [thread:$0]  %s5, 1024, %s419, [#allocation6], 64, 64, 4
        $region32: #{tpu_custom_call.1} parent=11 // pred_fallthru
          _
        // Predicated region
        $region33: #{tpu_custom_call.1} parent=11 // pred_check
          %p425 = pneg %p181
        $region34: #{tpu_custom_call.1} parent=11 // pred_check_branch
          %427 = sbr.rel (%p425) target = $region36
        $region35: #{tpu_custom_call.1} parent=11 // pred_region
          _
        $region36: #{tpu_custom_call.1} parent=11 // pred_fallthru
          _
        // Predicated region
        $region37: #{tpu_custom_call.1} parent=11 // pred_check
          %p428 = pneg %p202
        $region38: #{tpu_custom_call.1} parent=11 // pred_check_branch
          %430 = sbr.rel (%p428) target = $region40
        $region39: #{tpu_custom_call.1} parent=11 // pred_region
          _
        $region40: #{tpu_custom_call.1} parent=11 // pred_fallthru
          _
        // Predicated region
        $region41: #{tpu_custom_call.1} parent=11 // pred_check
          %p431 = pneg %p223
        $region42: #{tpu_custom_call.1} parent=11 // pred_check_branch
          %433 = sbr.rel (%p431) target = $region44
        $region43: #{tpu_custom_call.1} parent=11 // pred_region
          _
        $region44: #{tpu_custom_call.1} parent=11 // pred_fallthru
          _
        // Predicated region
        $region45: #{tpu_custom_call.1} parent=11 // pred_check
          %p434 = pneg %p244
        $region46: #{tpu_custom_call.1} parent=11 // pred_check_branch
          %436 = sbr.rel (%p434) target = $region48
        $region47: #{tpu_custom_call.1} parent=11 // pred_region
          _
        $region48: #{tpu_custom_call.1} parent=11 // pred_fallthru
          _
        // Predicated region
        $region49: #{tpu_custom_call.1} parent=11 // pred_check
          %p437 = pneg %p265
        $region50: #{tpu_custom_call.1} parent=11 // pred_check_branch
          %439 = sbr.rel (%p437) target = $region52
        $region51: #{tpu_custom_call.1} parent=11 // pred_region
          _
        $region52: #{tpu_custom_call.1} parent=11 // pred_fallthru
          _
        // Predicated region
        $region53: #{tpu_custom_call.1} parent=11 // pred_check
          %p440 = pneg %p286
        $region54: #{tpu_custom_call.1} parent=11 // pred_check_branch
          %442 = sbr.rel (%p440) target = $region56
        $region55: #{tpu_custom_call.1} parent=11 // pred_region
          %s444 = ssub.s32 1024, 1024
          %445 = vsyncadd [#allocation9], %s444
          %s446 = sshll.u32 [#allocation8], 4
          %s447 = int_to_ptr.vmem [resolvable:$true] %s446
          %452 = dma.hbm_to_vmem [thread:$0]  %s11, 1024, %s447, [#allocation9], 64, 64, 4
        $region56: #{tpu_custom_call.1} parent=11 // pred_fallthru
          _
        // Predicated region
        $region57: #{tpu_custom_call.1} parent=11 // pred_check
          %p453 = pneg %p307
        $region58: #{tpu_custom_call.1} parent=11 // pred_check_branch
          %455 = sbr.rel (%p453) target = $region60
        $region59: #{tpu_custom_call.1} parent=11 // pred_region
          _
        $region60: #{tpu_custom_call.1} parent=11 // pred_fallthru
          _
        // Predicated region
        $region61: #{tpu_custom_call.1} parent=11 // pred_check
          %p456 = pneg %p328
        $region62: #{tpu_custom_call.1} parent=11 // pred_check_branch
          %458 = sbr.rel (%p456) target = $region64
        $region63: #{tpu_custom_call.1} parent=11 // pred_region
          _
        $region64: #{tpu_custom_call.1} parent=11 // pred_fallthru
          _
        // Predicated region
        $region65: #{tpu_custom_call.1} parent=11 // pred_check
          %p459 = pneg %p349
        $region66: #{tpu_custom_call.1} parent=11 // pred_check_branch
          %461 = sbr.rel (%p459) target = $region68
        $region67: #{tpu_custom_call.1} parent=11 // pred_region
          _
        $region68: #{tpu_custom_call.1} parent=11 // pred_fallthru
          _
      $region12: #{tpu_custom_call.1} parent=5 // pred_fallthru
        _
      %p462 = scmp.lt.s32.totalorder %s29, 2
      // Predicated region
      $region69: #{tpu_custom_call.1} parent=5 // pred_check
        %p463 = pneg %p462
      $region70: #{tpu_custom_call.1} parent=5 // pred_check_branch
        %465 = sbr.rel (%p463) target = $region72
      $region71: #{tpu_custom_call.1} parent=5 // pred_region
        // Predicated region
        $region73: #{tpu_custom_call.1} parent=71 // pred_check
          %p466 = pneg %p49
        $region74: #{tpu_custom_call.1} parent=71 // pred_check_branch
          %468 = sbr.rel (%p466) target = $region76
        $region75: #{tpu_custom_call.1} parent=71 // pred_region
          %s469 = sand.u32 %s39, 1
          %s470 = scalar_lea.sflag [#allocation3], %s469
          %s471 = sand.u32 %s39, 1
          %s472 = smul.addr %s471, 128
          %s473 = scalar_lea.vmem [#allocation2], %s472
          %s474 = smul.u32 8, %s29
          %s476 = ssub.s32 2048, 2048
          %477 = vsyncadd %s470, %s476
          %s478 = smul.addr %s474, 2
          %s479 = smul.addr %s478, 128
          %s480 = scalar_lea.hbm %s0, %s479
          %s481 = sshll.u32 %s473, 4
          %s482 = int_to_ptr.vmem [resolvable:$true] %s481
          %487 = dma.hbm_to_vmem [thread:$0]  %s480, 2048, %s482, %s470, 128, 128, 8
        $region76: #{tpu_custom_call.1} parent=71 // pred_fallthru
          _
      $region72: #{tpu_custom_call.1} parent=5 // pred_fallthru
        _
      %p488 = scmp.le.s32.totalorder 1, %s29
      %p489 = scmp.lt.s32.totalorder %s29, 3
      %p490 = pnand %p488, %p489
      %p491 = pneg %p490
      // Predicated region
      $region77: #{tpu_custom_call.1} parent=5 // pred_check
        _
      $region78: #{tpu_custom_call.1} parent=5 // pred_check_branch
        %493 = sbr.rel (%p490) target = $region80
      $region79: #{tpu_custom_call.1} parent=5 // pred_region
        %s494 = ssub.s32 %s29, 1
        %s495 = sand.u32 %s42, 1
        %s496 = scalar_lea.sflag [#allocation3], %s495
        %s497 = sand.u32 %s42, 1
        %s498 = smul.addr %s497, 128
        %s499 = scalar_lea.vmem [#allocation2], %s498
        // Predicated region
        $region81: #{tpu_custom_call.1} parent=79 // pred_check
          %p500 = pneg %p55
        $region82: #{tpu_custom_call.1} parent=79 // pred_check_branch
          %502 = sbr.rel (%p500) target = $region84
        $region83: #{tpu_custom_call.1} parent=79 // pred_region
          %503 = dma.done %s496, 2048
        $region84: #{tpu_custom_call.1} parent=79 // pred_fallthru
          _
        // Predicated region
        $region85: #{tpu_custom_call.1} parent=79 // pred_check
          %p504 = pneg %p118
        $region86: #{tpu_custom_call.1} parent=79 // pred_check_branch
          %506 = sbr.rel (%p504) target = $region88
        $region87: #{tpu_custom_call.1} parent=79 // pred_region
          %507 = dma.done [#allocation6], 1024
        $region88: #{tpu_custom_call.1} parent=79 // pred_fallthru
          _
        // Predicated region
        $region89: #{tpu_custom_call.1} parent=79 // pred_check
          %p508 = pneg %p160
        $region90: #{tpu_custom_call.1} parent=79 // pred_check_branch
          %510 = sbr.rel (%p508) target = $region92
        $region91: #{tpu_custom_call.1} parent=79 // pred_region
          %511 = dma.done [#allocation6], 1024
        $region92: #{tpu_custom_call.1} parent=79 // pred_fallthru
          _
        // Predicated region
        $region93: #{tpu_custom_call.1} parent=79 // pred_check
          %p512 = pneg %p286
        $region94: #{tpu_custom_call.1} parent=79 // pred_check_branch
          %514 = sbr.rel (%p512) target = $region96
        $region95: #{tpu_custom_call.1} parent=79 // pred_region
          %515 = dma.done [#allocation9], 1024
        $region96: #{tpu_custom_call.1} parent=79 // pred_fallthru
          _
        %s516 = sand.u32 %s42, 1
        %s517 = scalar_lea.sflag [#allocation3], %s516
        %s518 = sand.u32 %s42, 1
        %s519 = smul.addr %s518, 128
        %s520 = scalar_lea.vmem [#allocation2], %s519
        %p521 = pneg %p55
        %p522 = pneg %p52
        %p523 = pneg %p76
        %p524 = pneg %p73
        %p525 = pneg %p97
        %p526 = pneg %p94
        %p527 = pneg %p118
        %p528 = pneg %p115
        %p529 = pneg %p139
        %p530 = pneg %p136
        %p531 = pneg %p160
        %p532 = pneg %p157
        %p533 = pneg %p181
        %p534 = pneg %p178
        %p535 = pneg %p202
        %p536 = pneg %p199
        %p537 = pneg %p223
        %p538 = pneg %p220
        %p539 = pneg %p244
        %p540 = pneg %p241
        %p541 = pneg %p265
        %p542 = pneg %p262
        %p543 = pneg %p286
        %p544 = pneg %p283
        %p545 = pneg %p307
        %p546 = pneg %p304
        %p547 = pneg %p328
        %p548 = pneg %p325
        %p549 = pneg %p349
        %p550 = pneg %p346
        %p551 = pneg %p375
        %p552 = pneg %p372
        %s553 = sand.u32 %s362, 1
        %s554 = scalar_lea.sflag [#allocation4], %s553
        %s555 = sand.u32 %s362, 1
        %s556 = smul.addr %s555, 128
        %s557 = scalar_lea.vmem [#allocation10], %s556
        %s558 = smul.u32 8, %s34
        %s559 = smul.u32 8, %s34
        %v561 = vld [vmem:[%s499] sm:$0xff]
        %v562 = vld [vmem:[%s499 + $0x8] sm:$0xff]
        %v563 = vld [vmem:[%s499 + $0x10] sm:$0xff]
        %v564 = vld [vmem:[%s499 + $0x18] sm:$0xff]
        %v565 = vld [vmem:[%s499 + $0x20] sm:$0xff]
        %v566 = vld [vmem:[%s499 + $0x28] sm:$0xff]
        %v567 = vld [vmem:[%s499 + $0x30] sm:$0xff]
        %v568 = vld [vmem:[%s499 + $0x38] sm:$0xff]
        %v569 = vld [vmem:[%s499 + $0x40] sm:$0xff]
        %v570 = vld [vmem:[%s499 + $0x48] sm:$0xff]
        %v571 = vld [vmem:[%s499 + $0x50] sm:$0xff]
        %v572 = vld [vmem:[%s499 + $0x58] sm:$0xff]
        %v573 = vld [vmem:[%s499 + $0x60] sm:$0xff]
        %v574 = vld [vmem:[%s499 + $0x68] sm:$0xff]
        %v575 = vld [vmem:[%s499 + $0x70] sm:$0xff]
        %v576 = vld [vmem:[%s499 + $0x78] sm:$0xff]
        %577 = vadd.xlane.f32.xlu0 %v561
        %v578 = vpop.xlane.xlu0 %577
        %579 = vadd.xlane.f32.xlu0 %v562
        %v580 = vpop.xlane.xlu0 %579
        %581 = vadd.xlane.f32.xlu0 %v563
        %v582 = vpop.xlane.xlu0 %581
        %583 = vadd.xlane.f32.xlu0 %v564
        %v584 = vpop.xlane.xlu0 %583
        %585 = vadd.xlane.f32.xlu0 %v565
        %v586 = vpop.xlane.xlu0 %585
        %587 = vadd.xlane.f32.xlu0 %v566
        %v588 = vpop.xlane.xlu0 %587
        %589 = vadd.xlane.f32.xlu0 %v567
        %v590 = vpop.xlane.xlu0 %589
        %591 = vadd.xlane.f32.xlu0 %v568
        %v592 = vpop.xlane.xlu0 %591
        %593 = vadd.xlane.f32.xlu0 %v569
        %v594 = vpop.xlane.xlu0 %593
        %595 = vadd.xlane.f32.xlu0 %v570
        %v596 = vpop.xlane.xlu0 %595
        %597 = vadd.xlane.f32.xlu0 %v571
        %v598 = vpop.xlane.xlu0 %597
        %599 = vadd.xlane.f32.xlu0 %v572
        %v600 = vpop.xlane.xlu0 %599
        %601 = vadd.xlane.f32.xlu0 %v573
        %v602 = vpop.xlane.xlu0 %601
        %603 = vadd.xlane.f32.xlu0 %v574
        %v604 = vpop.xlane.xlu0 %603
        %605 = vadd.xlane.f32.xlu0 %v575
        %v606 = vpop.xlane.xlu0 %605
        %607 = vadd.xlane.f32.xlu0 %v576
        %v608 = vpop.xlane.xlu0 %607
        %v609 = vrcp.pop 128.0
        %v610 = vmul.f32 %v578, %v609
        %v611 = vmul.f32 %v580, %v609
        %v612 = vmul.f32 %v582, %v609
        %v613 = vmul.f32 %v584, %v609
        %v614 = vmul.f32 %v586, %v609
        %v615 = vmul.f32 %v588, %v609
        %v616 = vmul.f32 %v590, %v609
        %v617 = vmul.f32 %v592, %v609
        %v618 = vmul.f32 %v594, %v609
        %v619 = vmul.f32 %v596, %v609
        %v620 = vmul.f32 %v598, %v609
        %v621 = vmul.f32 %v600, %v609
        %v622 = vmul.f32 %v602, %v609
        %v623 = vmul.f32 %v604, %v609
        %v624 = vmul.f32 %v606, %v609
        %v625 = vmul.f32 %v608, %v609
        %v626 = vmul.f32 %v561, %v561
        %v627 = vmul.f32 %v562, %v562
        %v628 = vmul.f32 %v563, %v563
        %v629 = vmul.f32 %v564, %v564
        %v630 = vmul.f32 %v565, %v565
        %v631 = vmul.f32 %v566, %v566
        %v632 = vmul.f32 %v567, %v567
        %v633 = vmul.f32 %v568, %v568
        %v634 = vmul.f32 %v569, %v569
        %v635 = vmul.f32 %v570, %v570
        %v636 = vmul.f32 %v571, %v571
        %v637 = vmul.f32 %v572, %v572
        %v638 = vmul.f32 %v573, %v573
        %v639 = vmul.f32 %v574, %v574
        %v640 = vmul.f32 %v575, %v575
        %v641 = vmul.f32 %v576, %v576
        %642 = vadd.xlane.f32.xlu0 %v626
        %v643 = vpop.xlane.xlu0 %642
        %644 = vadd.xlane.f32.xlu0 %v627
        %v645 = vpop.xlane.xlu0 %644
        %646 = vadd.xlane.f32.xlu0 %v628
        %v647 = vpop.xlane.xlu0 %646
        %648 = vadd.xlane.f32.xlu0 %v629
        %v649 = vpop.xlane.xlu0 %648
        %650 = vadd.xlane.f32.xlu0 %v630
        %v651 = vpop.xlane.xlu0 %650
        %652 = vadd.xlane.f32.xlu0 %v631
        %v653 = vpop.xlane.xlu0 %652
        %654 = vadd.xlane.f32.xlu0 %v632
        %v655 = vpop.xlane.xlu0 %654
        %656 = vadd.xlane.f32.xlu0 %v633
        %v657 = vpop.xlane.xlu0 %656
        %658 = vadd.xlane.f32.xlu0 %v634
        %v659 = vpop.xlane.xlu0 %658
        %660 = vadd.xlane.f32.xlu0 %v635
        %v661 = vpop.xlane.xlu0 %660
        %662 = vadd.xlane.f32.xlu0 %v636
        %v663 = vpop.xlane.xlu0 %662
        %664 = vadd.xlane.f32.xlu0 %v637
        %v665 = vpop.xlane.xlu0 %664
        %666 = vadd.xlane.f32.xlu0 %v638
        %v667 = vpop.xlane.xlu0 %666
        %668 = vadd.xlane.f32.xlu0 %v639
        %v669 = vpop.xlane.xlu0 %668
        %670 = vadd.xlane.f32.xlu0 %v640
        %v671 = vpop.xlane.xlu0 %670
        %672 = vadd.xlane.f32.xlu0 %v641
        %v673 = vpop.xlane.xlu0 %672
        %v674 = vmul.f32 %v643, %v609
        %v675 = vmul.f32 %v645, %v609
        %v676 = vmul.f32 %v647, %v609
        %v677 = vmul.f32 %v649, %v609
        %v678 = vmul.f32 %v651, %v609
        %v679 = vmul.f32 %v653, %v609
        %v680 = vmul.f32 %v655, %v609
        %v681 = vmul.f32 %v657, %v609
        %v682 = vmul.f32 %v659, %v609
        %v683 = vmul.f32 %v661, %v609
        %v684 = vmul.f32 %v663, %v609
        %v685 = vmul.f32 %v665, %v609
        %v686 = vmul.f32 %v667, %v609
        %v687 = vmul.f32 %v669, %v609
        %v688 = vmul.f32 %v671, %v609
        %v689 = vmul.f32 %v673, %v609
        %v690 = vmul.f32 %v610, %v610
        %v691 = vmul.f32 %v611, %v611
        %v692 = vmul.f32 %v612, %v612
        %v693 = vmul.f32 %v613, %v613
        %v694 = vmul.f32 %v614, %v614
        %v695 = vmul.f32 %v615, %v615
        %v696 = vmul.f32 %v616, %v616
        %v697 = vmul.f32 %v617, %v617
        %v698 = vmul.f32 %v618, %v618
        %v699 = vmul.f32 %v619, %v619
        %v700 = vmul.f32 %v620, %v620
        %v701 = vmul.f32 %v621, %v621
        %v702 = vmul.f32 %v622, %v622
        %v703 = vmul.f32 %v623, %v623
        %v704 = vmul.f32 %v624, %v624
        %v705 = vmul.f32 %v625, %v625
        %v706 = vsub.f32 %v674, %v690
        %v707 = vsub.f32 %v675, %v691
        %v708 = vsub.f32 %v676, %v692
        %v709 = vsub.f32 %v677, %v693
        %v710 = vsub.f32 %v678, %v694
        %v711 = vsub.f32 %v679, %v695
        %v712 = vsub.f32 %v680, %v696
        %v713 = vsub.f32 %v681, %v697
        %v714 = vsub.f32 %v682, %v698
        %v715 = vsub.f32 %v683, %v699
        %v716 = vsub.f32 %v684, %v700
        %v717 = vsub.f32 %v685, %v701
        %v718 = vsub.f32 %v686, %v702
        %v719 = vsub.f32 %v687, %v703
        %v720 = vsub.f32 %v688, %v704
        %v721 = vsub.f32 %v689, %v705
        %v722 = vmax.f32 %v706, 0.0
        %v723 = vmax.f32 %v707, 0.0
        %v724 = vmax.f32 %v708, 0.0
        %v725 = vmax.f32 %v709, 0.0
        %v726 = vmax.f32 %v710, 0.0
        %v727 = vmax.f32 %v711, 0.0
        %v728 = vmax.f32 %v712, 0.0
        %v729 = vmax.f32 %v713, 0.0
        %v730 = vmax.f32 %v714, 0.0
        %v731 = vmax.f32 %v715, 0.0
        %v732 = vmax.f32 %v716, 0.0
        %v733 = vmax.f32 %v717, 0.0
        %v734 = vmax.f32 %v718, 0.0
        %v735 = vmax.f32 %v719, 0.0
        %v736 = vmax.f32 %v720, 0.0
        %v737 = vmax.f32 %v721, 0.0
        %v738 = vadd.f32 %v722, 1e-05
        %v739 = vadd.f32 %v723, 1e-05
        %v740 = vadd.f32 %v724, 1e-05
        %v741 = vadd.f32 %v725, 1e-05
        %v742 = vadd.f32 %v726, 1e-05
        %v743 = vadd.f32 %v727, 1e-05
        %v744 = vadd.f32 %v728, 1e-05
        %v745 = vadd.f32 %v729, 1e-05
        %v746 = vadd.f32 %v730, 1e-05
        %v747 = vadd.f32 %v731, 1e-05
        %v748 = vadd.f32 %v732, 1e-05
        %v749 = vadd.f32 %v733, 1e-05
        %v750 = vadd.f32 %v734, 1e-05
        %v751 = vadd.f32 %v735, 1e-05
        %v752 = vadd.f32 %v736, 1e-05
        %v753 = vadd.f32 %v737, 1e-05
        %v754 = vrsqrt.pop %v738
        %v755 = vrsqrt.pop %v739
        %v756 = vrsqrt.pop %v740
        %v757 = vrsqrt.pop %v741
        %v758 = vrsqrt.pop %v742
        %v759 = vrsqrt.pop %v743
        %v760 = vrsqrt.pop %v744
        %v761 = vrsqrt.pop %v745
        %v762 = vrsqrt.pop %v746
        %v763 = vrsqrt.pop %v747
        %v764 = vrsqrt.pop %v748
        %v765 = vrsqrt.pop %v749
        %v766 = vrsqrt.pop %v750
        %v767 = vrsqrt.pop %v751
        %v768 = vrsqrt.pop %v752
        %v769 = vrsqrt.pop %v753
        %v770 = vsub.f32 %v561, %v610
        %v771 = vsub.f32 %v562, %v611
        %v772 = vsub.f32 %v563, %v612
        %v773 = vsub.f32 %v564, %v613
        %v774 = vsub.f32 %v565, %v614
        %v775 = vsub.f32 %v566, %v615
        %v776 = vsub.f32 %v567, %v616
        %v777 = vsub.f32 %v568, %v617
        %v778 = vsub.f32 %v569, %v618
        %v779 = vsub.f32 %v570, %v619
        %v780 = vsub.f32 %v571, %v620
        %v781 = vsub.f32 %v572, %v621
        %v782 = vsub.f32 %v573, %v622
        %v783 = vsub.f32 %v574, %v623
        %v784 = vsub.f32 %v575, %v624
        %v785 = vsub.f32 %v576, %v625
        %v786 = vmul.f32 %v770, %v754
        %v787 = vmul.f32 %v771, %v755
        %v788 = vmul.f32 %v772, %v756
        %v789 = vmul.f32 %v773, %v757
        %v790 = vmul.f32 %v774, %v758
        %v791 = vmul.f32 %v775, %v759
        %v792 = vmul.f32 %v776, %v760
        %v793 = vmul.f32 %v777, %v761
        %v794 = vmul.f32 %v778, %v762
        %v795 = vmul.f32 %v779, %v763
        %v796 = vmul.f32 %v780, %v764
        %v797 = vmul.f32 %v781, %v765
        %v798 = vmul.f32 %v782, %v766
        %v799 = vmul.f32 %v783, %v767
        %v800 = vmul.f32 %v784, %v768
        %v801 = vmul.f32 %v785, %v769
        %v802 = vld [vmem:[%s1] sm:$0x1]
        %v804 = vlaneseq
        %v805 = vshrl.u32 %v804, 7
        %v806 = vsub.s32 0, %v805
        %v807 = vrot.slane %v802, %v806
        %v809 = vmul.f32 %v786, %v807
        %v810 = vmul.f32 %v787, %v807
        %v811 = vmul.f32 %v788, %v807
        %v812 = vmul.f32 %v789, %v807
        %v813 = vmul.f32 %v790, %v807
        %v814 = vmul.f32 %v791, %v807
        %v815 = vmul.f32 %v792, %v807
        %v816 = vmul.f32 %v793, %v807
        %v817 = vmul.f32 %v794, %v807
        %v818 = vmul.f32 %v795, %v807
        %v819 = vmul.f32 %v796, %v807
        %v820 = vmul.f32 %v797, %v807
        %v821 = vmul.f32 %v798, %v807
        %v822 = vmul.f32 %v799, %v807
        %v823 = vmul.f32 %v800, %v807
        %v824 = vmul.f32 %v801, %v807
        %v825 = vld [vmem:[%s2] sm:$0x1]
        %v827 = vlaneseq
        %v828 = vshrl.u32 %v827, 7
        %v829 = vsub.s32 0, %v828
        %v830 = vrot.slane %v825, %v829
        %v832 = vadd.f32 %v809, %v830
        %v833 = vadd.f32 %v810, %v830
        %v834 = vadd.f32 %v811, %v830
        %v835 = vadd.f32 %v812, %v830
        %v836 = vadd.f32 %v813, %v830
        %v837 = vadd.f32 %v814, %v830
        %v838 = vadd.f32 %v815, %v830
        %v839 = vadd.f32 %v816, %v830
        %v840 = vadd.f32 %v817, %v830
        %v841 = vadd.f32 %v818, %v830
        %v842 = vadd.f32 %v819, %v830
        %v843 = vadd.f32 %v820, %v830
        %v844 = vadd.f32 %v821, %v830
        %v845 = vadd.f32 %v822, %v830
        %v846 = vadd.f32 %v823, %v830
        %v847 = vadd.f32 %v824, %v830
        %v848 = vpack.c.bf16 %v833, %v832
        %v849 = vpack.c.bf16 %v835, %v834
        %v850 = vpack.c.bf16 %v837, %v836
        %v851 = vpack.c.bf16 %v839, %v838
        %v852 = vpack.c.bf16 %v841, %v840
        %v853 = vpack.c.bf16 %v843, %v842
        %v854 = vpack.c.bf16 %v845, %v844
        %v855 = vpack.c.bf16 %v847, %v846
        %v856 = vld [vmem:[#allocation7] sm:$0xf]
        %v857 = vld [vmem:[#allocation7 + $0x4] sm:$0xf]
        %v858 = vld [vmem:[#allocation7 + $0x8] sm:$0xf]
        %v859 = vld [vmem:[#allocation7 + $0xc] sm:$0xf]
        %v860 = vld [vmem:[#allocation7 + $0x10] sm:$0xf]
        %v861 = vld [vmem:[#allocation7 + $0x14] sm:$0xf]
        %v862 = vld [vmem:[#allocation7 + $0x18] sm:$0xf]
        %v863 = vld [vmem:[#allocation7 + $0x1c] sm:$0xf]
        %v864 = vld [vmem:[#allocation7 + $0x20] sm:$0xf]
        %v865 = vld [vmem:[#allocation7 + $0x24] sm:$0xf]
        %v866 = vld [vmem:[#allocation7 + $0x28] sm:$0xf]
        %v867 = vld [vmem:[#allocation7 + $0x2c] sm:$0xf]
        %v868 = vld [vmem:[#allocation7 + $0x30] sm:$0xf]
        %v869 = vld [vmem:[#allocation7 + $0x34] sm:$0xf]
        %v870 = vld [vmem:[#allocation7 + $0x38] sm:$0xf]
        %v871 = vld [vmem:[#allocation7 + $0x3c] sm:$0xf]
        %v872 = vld [vmem:[%s6] sm:$0x1]
        %v874 = vlaneseq
        %v875 = vshrl.u32 %v874, 7
        %v876 = vsub.s32 0, %v875
        %v877 = vrot.slane %v872, %v876
        %v895 = vunpack.c.l.b16 %v856
        %v896 = vunpack.c.l.b16 %v857
        %v897 = vunpack.c.l.b16 %v858
        %v898 = vunpack.c.l.b16 %v859
        %v899 = vunpack.c.l.b16 %v860
        %v900 = vunpack.c.l.b16 %v861
        %v901 = vunpack.c.l.b16 %v862
        %v902 = vunpack.c.l.b16 %v863
        %v903 = vunpack.c.l.b16 %v864
        %v904 = vunpack.c.l.b16 %v865
        %v905 = vunpack.c.l.b16 %v866
        %v906 = vunpack.c.l.b16 %v867
        %v907 = vunpack.c.l.b16 %v868
        %v908 = vunpack.c.l.b16 %v869
        %v909 = vunpack.c.l.b16 %v870
        %v910 = vunpack.c.l.b16 %v871
        %v911 = vpack.c.b16 %v896, %v895
        %v912 = vpack.c.b16 %v898, %v897
        %v913 = vpack.c.b16 %v900, %v899
        %v914 = vpack.c.b16 %v902, %v901
        %v915 = vpack.c.b16 %v904, %v903
        %v916 = vpack.c.b16 %v906, %v905
        %v917 = vpack.c.b16 %v908, %v907
        %v918 = vpack.c.b16 %v910, %v909
        %927 = vmatprep.subr.bf16.mxu0 0
        %928 = vmatpush1.bf16.msra.mxu0 %v911
        %929 = vmatprep.subr.bf16.mxu0 0
        %930 = vmatpush1.bf16.msra.mxu0 %v912
        %931 = vmatprep.subr.bf16.mxu0 0
        %932 = vmatpush1.bf16.msra.mxu0 %v913
        %933 = vmatprep.subr.bf16.mxu0 0
        %934 = vmatpush1.bf16.msra.mxu0 %v914
        %935 = vmatprep.subr.bf16.mxu0 0
        %936 = vmatpush1.bf16.msra.mxu0 %v915
        %937 = vmatprep.subr.bf16.mxu0 0
        %938 = vmatpush1.bf16.msra.mxu0 %v916
        %939 = vmatprep.subr.bf16.mxu0 0
        %940 = vmatpush1.bf16.msra.mxu0 %v917
        %941 = vmatprep.subr.bf16.mxu0 0
        %942 = vmatpush1.bf16.msra.mxu0 %v918
        %943 = vmatprep.subr.bf16.mxu0 0
        %944 = vmatpush1.bf16.msra.mxu0 0
        %945 = vmatprep.subr.bf16.mxu0 0
        %946 = vmatpush1.bf16.msra.mxu0 0
        %947 = vmatprep.subr.bf16.mxu0 0
        %948 = vmatpush1.bf16.msra.mxu0 0
        %949 = vmatprep.subr.bf16.mxu0 0
        %950 = vmatpush1.bf16.msra.mxu0 0
        %951 = vmatprep.subr.bf16.mxu0 0
        %952 = vmatpush1.bf16.msra.mxu0 0
        %953 = vmatprep.subr.bf16.mxu0 0
        %954 = vmatpush1.bf16.msra.mxu0 0
        %955 = vmatprep.subr.bf16.mxu0 0
        %956 = vmatpush1.bf16.msra.mxu0 0
        %957 = vmatprep.subr.bf16.mxu0 0
        %958 = vmatpush1.bf16.msra.mxu0 0
        %959 = vmatprep.mubr.bf16.mxu0 0
        %960 = vmatmul.mubr.bf16.gmra.mrb[0].mxu0 %v848
        %v961 = vpop.f32.mrb[0].mxu0
        %v962 = vadd.f32 %v877, %v961
        %v963 = vpop.f32.mrb[0].mxu0
        %v964 = vpop.f32.mrb[0].mxu0
        %v965 = vadd.f32 %v877, %v964
        %v966 = vpop.f32.mrb[0].mxu0
        %967 = vmatprep.mubr.bf16.mxu0 0
        %968 = vmatmul.mubr.bf16.gmra.mrb[0].mxu0 %v849
        %v969 = vpop.f32.mrb[0].mxu0
        %v970 = vadd.f32 %v877, %v969
        %v971 = vpop.f32.mrb[0].mxu0
        %v972 = vpop.f32.mrb[0].mxu0
        %v973 = vadd.f32 %v877, %v972
        %v974 = vpop.f32.mrb[0].mxu0
        %975 = vmatprep.mubr.bf16.mxu0 0
        %976 = vmatmul.mubr.bf16.gmra.mrb[0].mxu0 %v850
        %v977 = vpop.f32.mrb[0].mxu0
        %v978 = vadd.f32 %v877, %v977
        %v979 = vpop.f32.mrb[0].mxu0
        %v980 = vpop.f32.mrb[0].mxu0
        %v981 = vadd.f32 %v877, %v980
        %v982 = vpop.f32.mrb[0].mxu0
        %983 = vmatprep.mubr.bf16.mxu0 0
        %984 = vmatmul.mubr.bf16.gmra.mrb[0].mxu0 %v851
        %v985 = vpop.f32.mrb[0].mxu0
        %v986 = vadd.f32 %v877, %v985
        %v987 = vpop.f32.mrb[0].mxu0
        %v988 = vpop.f32.mrb[0].mxu0
        %v989 = vadd.f32 %v877, %v988
        %v990 = vpop.f32.mrb[0].mxu0
        %991 = vmatprep.mubr.bf16.mxu0 0
        %992 = vmatmul.mubr.bf16.gmra.mrb[0].mxu0 %v852
        %v993 = vpop.f32.mrb[0].mxu0
        %v994 = vadd.f32 %v877, %v993
        %v995 = vpop.f32.mrb[0].mxu0
        %v996 = vpop.f32.mrb[0].mxu0
        %v997 = vadd.f32 %v877, %v996
        %v998 = vpop.f32.mrb[0].mxu0
        %999 = vmatprep.mubr.bf16.mxu0 0
        %1000 = vmatmul.mubr.bf16.gmra.mrb[0].mxu0 %v853
        %v1001 = vpop.f32.mrb[0].mxu0
        %v1002 = vadd.f32 %v877, %v1001
        %v1003 = vpop.f32.mrb[0].mxu0
        %v1004 = vpop.f32.mrb[0].mxu0
        %v1005 = vadd.f32 %v877, %v1004
        %v1006 = vpop.f32.mrb[0].mxu0
        %1007 = vmatprep.mubr.bf16.mxu0 0
        %1008 = vmatmul.mubr.bf16.gmra.mrb[0].mxu0 %v854
        %v1009 = vpop.f32.mrb[0].mxu0
        %v1010 = vadd.f32 %v877, %v1009
        %v1011 = vpop.f32.mrb[0].mxu0
        %v1012 = vpop.f32.mrb[0].mxu0
        %v1013 = vadd.f32 %v877, %v1012
        %v1014 = vpop.f32.mrb[0].mxu0
        %1015 = vmatprep.mubr.bf16.mxu0 0
        %1016 = vmatmul.mubr.bf16.gmra.mrb[0].mxu0 %v855
        %v1017 = vpop.f32.mrb[0].mxu0
        %v1018 = vadd.f32 %v877, %v1017
        %v1019 = vpop.f32.mrb[0].mxu0
        %v1020 = vpop.f32.mrb[0].mxu0
        %v1021 = vadd.f32 %v877, %v1020
        %v1022 = vpop.f32.mrb[0].mxu0
        %1023 = vdwg.mxu0
        %v1024 = vmul.f32 %v962, 0.5
        %v1025 = vmul.f32 %v965, 0.5
        %v1026 = vmul.f32 %v970, 0.5
        %v1027 = vmul.f32 %v973, 0.5
        %v1028 = vmul.f32 %v978, 0.5
        %v1029 = vmul.f32 %v981, 0.5
        %v1030 = vmul.f32 %v986, 0.5
        %v1031 = vmul.f32 %v989, 0.5
        %v1032 = vmul.f32 %v994, 0.5
        %v1033 = vmul.f32 %v997, 0.5
        %v1034 = vmul.f32 %v1002, 0.5
        %v1035 = vmul.f32 %v1005, 0.5
        %v1036 = vmul.f32 %v1010, 0.5
        %v1037 = vmul.f32 %v1013, 0.5
        %v1038 = vmul.f32 %v1018, 0.5
        %v1039 = vmul.f32 %v1021, 0.5
        %v1040 = vmul.f32 %v962, 0.70710677
        %v1041 = vmul.f32 %v965, 0.70710677
        %v1042 = vmul.f32 %v970, 0.70710677
        %v1043 = vmul.f32 %v973, 0.70710677
        %v1044 = vmul.f32 %v978, 0.70710677
        %v1045 = vmul.f32 %v981, 0.70710677
        %v1046 = vmul.f32 %v986, 0.70710677
        %v1047 = vmul.f32 %v989, 0.70710677
        %v1048 = vmul.f32 %v994, 0.70710677
        %v1049 = vmul.f32 %v997, 0.70710677
        %v1050 = vmul.f32 %v1002, 0.70710677
        %v1051 = vmul.f32 %v1005, 0.70710677
        %v1052 = vmul.f32 %v1010, 0.70710677
        %v1053 = vmul.f32 %v1013, 0.70710677
        %v1054 = vmul.f32 %v1018, 0.70710677
        %v1055 = vmul.f32 %v1021, 0.70710677
        %v1056 = verf.f32.pop %v1040
        %v1057 = verf.f32.pop %v1041
        %v1058 = verf.f32.pop %v1042
        %v1059 = verf.f32.pop %v1043
        %v1060 = verf.f32.pop %v1044
        %v1061 = verf.f32.pop %v1045
        %v1062 = verf.f32.pop %v1046
        %v1063 = verf.f32.pop %v1047
        %v1064 = verf.f32.pop %v1048
        %v1065 = verf.f32.pop %v1049
        %v1066 = verf.f32.pop %v1050
        %v1067 = verf.f32.pop %v1051
        %v1068 = verf.f32.pop %v1052
        %v1069 = verf.f32.pop %v1053
        %v1070 = verf.f32.pop %v1054
        %v1071 = verf.f32.pop %v1055
        %v1072 = vadd.f32 %v1056, 1.0
        %v1073 = vadd.f32 %v1057, 1.0
        %v1074 = vadd.f32 %v1058, 1.0
        %v1075 = vadd.f32 %v1059, 1.0
        %v1076 = vadd.f32 %v1060, 1.0
        %v1077 = vadd.f32 %v1061, 1.0
        %v1078 = vadd.f32 %v1062, 1.0
        %v1079 = vadd.f32 %v1063, 1.0
        %v1080 = vadd.f32 %v1064, 1.0
        %v1081 = vadd.f32 %v1065, 1.0
        %v1082 = vadd.f32 %v1066, 1.0
        %v1083 = vadd.f32 %v1067, 1.0
        %v1084 = vadd.f32 %v1068, 1.0
        %v1085 = vadd.f32 %v1069, 1.0
        %v1086 = vadd.f32 %v1070, 1.0
        %v1087 = vadd.f32 %v1071, 1.0
        %v1088 = vmul.f32 %v1024, %v1072
        %v1089 = vmul.f32 %v1025, %v1073
        %v1090 = vmul.f32 %v1026, %v1074
        %v1091 = vmul.f32 %v1027, %v1075
        %v1092 = vmul.f32 %v1028, %v1076
        %v1093 = vmul.f32 %v1029, %v1077
        %v1094 = vmul.f32 %v1030, %v1078
        %v1095 = vmul.f32 %v1031, %v1079
        %v1096 = vmul.f32 %v1032, %v1080
        %v1097 = vmul.f32 %v1033, %v1081
        %v1098 = vmul.f32 %v1034, %v1082
        %v1099 = vmul.f32 %v1035, %v1083
        %v1100 = vmul.f32 %v1036, %v1084
        %v1101 = vmul.f32 %v1037, %v1085
        %v1102 = vmul.f32 %v1038, %v1086
        %v1103 = vmul.f32 %v1039, %v1087
        %v1104 = vld [vmem:[%s7] sm:$0x1]
        %v1105 = vld [vmem:[%s8] sm:$0x1]
        %1106 = vadd.xlane.f32.xlu0 %v1088
        %v1107 = vpop.xlane.xlu0 %1106
        %1108 = vadd.xlane.f32.xlu0 %v1089
        %v1109 = vpop.xlane.xlu0 %1108
        %1110 = vadd.xlane.f32.xlu0 %v1090
        %v1111 = vpop.xlane.xlu0 %1110
        %1112 = vadd.xlane.f32.xlu0 %v1091
        %v1113 = vpop.xlane.xlu0 %1112
        %1114 = vadd.xlane.f32.xlu0 %v1092
        %v1115 = vpop.xlane.xlu0 %1114
        %1116 = vadd.xlane.f32.xlu0 %v1093
        %v1117 = vpop.xlane.xlu0 %1116
        %1118 = vadd.xlane.f32.xlu0 %v1094
        %v1119 = vpop.xlane.xlu0 %1118
        %1120 = vadd.xlane.f32.xlu0 %v1095
        %v1121 = vpop.xlane.xlu0 %1120
        %1122 = vadd.xlane.f32.xlu0 %v1096
        %v1123 = vpop.xlane.xlu0 %1122
        %1124 = vadd.xlane.f32.xlu0 %v1097
        %v1125 = vpop.xlane.xlu0 %1124
        %1126 = vadd.xlane.f32.xlu0 %v1098
        %v1127 = vpop.xlane.xlu0 %1126
        %1128 = vadd.xlane.f32.xlu0 %v1099
        %v1129 = vpop.xlane.xlu0 %1128
        %1130 = vadd.xlane.f32.xlu0 %v1100
        %v1131 = vpop.xlane.xlu0 %1130
        %1132 = vadd.xlane.f32.xlu0 %v1101
        %v1133 = vpop.xlane.xlu0 %1132
        %1134 = vadd.xlane.f32.xlu0 %v1102
        %v1135 = vpop.xlane.xlu0 %1134
        %1136 = vadd.xlane.f32.xlu0 %v1103
        %v1137 = vpop.xlane.xlu0 %1136
        %v1138 = vmul.f32 %v1107, %v609
        %v1139 = vmul.f32 %v1109, %v609
        %v1140 = vmul.f32 %v1111, %v609
        %v1141 = vmul.f32 %v1113, %v609
        %v1142 = vmul.f32 %v1115, %v609
        %v1143 = vmul.f32 %v1117, %v609
        %v1144 = vmul.f32 %v1119, %v609
        %v1145 = vmul.f32 %v1121, %v609
        %v1146 = vmul.f32 %v1123, %v609
        %v1147 = vmul.f32 %v1125, %v609
        %v1148 = vmul.f32 %v1127, %v609
        %v1149 = vmul.f32 %v1129, %v609
        %v1150 = vmul.f32 %v1131, %v609
        %v1151 = vmul.f32 %v1133, %v609
        %v1152 = vmul.f32 %v1135, %v609
        %v1153 = vmul.f32 %v1137, %v609
        %v1154 = vmul.f32 %v1088, %v1088
        %v1155 = vmul.f32 %v1089, %v1089
        %v1156 = vmul.f32 %v1090, %v1090
        %v1157 = vmul.f32 %v1091, %v1091
        %v1158 = vmul.f32 %v1092, %v1092
        %v1159 = vmul.f32 %v1093, %v1093
        %v1160 = vmul.f32 %v1094, %v1094
        %v1161 = vmul.f32 %v1095, %v1095
        %v1162 = vmul.f32 %v1096, %v1096
        %v1163 = vmul.f32 %v1097, %v1097
        %v1164 = vmul.f32 %v1098, %v1098
        %v1165 = vmul.f32 %v1099, %v1099
        %v1166 = vmul.f32 %v1100, %v1100
        %v1167 = vmul.f32 %v1101, %v1101
        %v1168 = vmul.f32 %v1102, %v1102
        %v1169 = vmul.f32 %v1103, %v1103
        %1170 = vadd.xlane.f32.xlu0 %v1154
        %v1171 = vpop.xlane.xlu0 %1170
        %1172 = vadd.xlane.f32.xlu0 %v1155
        %v1173 = vpop.xlane.xlu0 %1172
        %1174 = vadd.xlane.f32.xlu0 %v1156
        %v1175 = vpop.xlane.xlu0 %1174
        %1176 = vadd.xlane.f32.xlu0 %v1157
        %v1177 = vpop.xlane.xlu0 %1176
        %1178 = vadd.xlane.f32.xlu0 %v1158
        %v1179 = vpop.xlane.xlu0 %1178
        %1180 = vadd.xlane.f32.xlu0 %v1159
        %v1181 = vpop.xlane.xlu0 %1180
        %1182 = vadd.xlane.f32.xlu0 %v1160
        %v1183 = vpop.xlane.xlu0 %1182
        %1184 = vadd.xlane.f32.xlu0 %v1161
        %v1185 = vpop.xlane.xlu0 %1184
        %1186 = vadd.xlane.f32.xlu0 %v1162
        %v1187 = vpop.xlane.xlu0 %1186
        %1188 = vadd.xlane.f32.xlu0 %v1163
        %v1189 = vpop.xlane.xlu0 %1188
        %1190 = vadd.xlane.f32.xlu0 %v1164
        %v1191 = vpop.xlane.xlu0 %1190
        %1192 = vadd.xlane.f32.xlu0 %v1165
        %v1193 = vpop.xlane.xlu0 %1192
        %1194 = vadd.xlane.f32.xlu0 %v1166
        %v1195 = vpop.xlane.xlu0 %1194
        %1196 = vadd.xlane.f32.xlu0 %v1167
        %v1197 = vpop.xlane.xlu0 %1196
        %1198 = vadd.xlane.f32.xlu0 %v1168
        %v1199 = vpop.xlane.xlu0 %1198
        %1200 = vadd.xlane.f32.xlu0 %v1169
        %v1201 = vpop.xlane.xlu0 %1200
        %v1202 = vmul.f32 %v1171, %v609
        %v1203 = vmul.f32 %v1173, %v609
        %v1204 = vmul.f32 %v1175, %v609
        %v1205 = vmul.f32 %v1177, %v609
        %v1206 = vmul.f32 %v1179, %v609
        %v1207 = vmul.f32 %v1181, %v609
        %v1208 = vmul.f32 %v1183, %v609
        %v1209 = vmul.f32 %v1185, %v609
        %v1210 = vmul.f32 %v1187, %v609
        %v1211 = vmul.f32 %v1189, %v609
        %v1212 = vmul.f32 %v1191, %v609
        %v1213 = vmul.f32 %v1193, %v609
        %v1214 = vmul.f32 %v1195, %v609
        %v1215 = vmul.f32 %v1197, %v609
        %v1216 = vmul.f32 %v1199, %v609
        %v1217 = vmul.f32 %v1201, %v609
        %v1218 = vmul.f32 %v1138, %v1138
        %v1219 = vmul.f32 %v1139, %v1139
        %v1220 = vmul.f32 %v1140, %v1140
        %v1221 = vmul.f32 %v1141, %v1141
        %v1222 = vmul.f32 %v1142, %v1142
        %v1223 = vmul.f32 %v1143, %v1143
        %v1224 = vmul.f32 %v1144, %v1144
        %v1225 = vmul.f32 %v1145, %v1145
        %v1226 = vmul.f32 %v1146, %v1146
        %v1227 = vmul.f32 %v1147, %v1147
        %v1228 = vmul.f32 %v1148, %v1148
        %v1229 = vmul.f32 %v1149, %v1149
        %v1230 = vmul.f32 %v1150, %v1150
        %v1231 = vmul.f32 %v1151, %v1151
        %v1232 = vmul.f32 %v1152, %v1152
        %v1233 = vmul.f32 %v1153, %v1153
        %v1234 = vsub.f32 %v1202, %v1218
        %v1235 = vsub.f32 %v1203, %v1219
        %v1236 = vsub.f32 %v1204, %v1220
        %v1237 = vsub.f32 %v1205, %v1221
        %v1238 = vsub.f32 %v1206, %v1222
        %v1239 = vsub.f32 %v1207, %v1223
        %v1240 = vsub.f32 %v1208, %v1224
        %v1241 = vsub.f32 %v1209, %v1225
        %v1242 = vsub.f32 %v1210, %v1226
        %v1243 = vsub.f32 %v1211, %v1227
        %v1244 = vsub.f32 %v1212, %v1228
        %v1245 = vsub.f32 %v1213, %v1229
        %v1246 = vsub.f32 %v1214, %v1230
        %v1247 = vsub.f32 %v1215, %v1231
        %v1248 = vsub.f32 %v1216, %v1232
        %v1249 = vsub.f32 %v1217, %v1233
        %v1250 = vmax.f32 %v1234, 0.0
        %v1251 = vmax.f32 %v1235, 0.0
        %v1252 = vmax.f32 %v1236, 0.0
        %v1253 = vmax.f32 %v1237, 0.0
        %v1254 = vmax.f32 %v1238, 0.0
        %v1255 = vmax.f32 %v1239, 0.0
        %v1256 = vmax.f32 %v1240, 0.0
        %v1257 = vmax.f32 %v1241, 0.0
        %v1258 = vmax.f32 %v1242, 0.0
        %v1259 = vmax.f32 %v1243, 0.0
        %v1260 = vmax.f32 %v1244, 0.0
        %v1261 = vmax.f32 %v1245, 0.0
        %v1262 = vmax.f32 %v1246, 0.0
        %v1263 = vmax.f32 %v1247, 0.0
        %v1264 = vmax.f32 %v1248, 0.0
        %v1265 = vmax.f32 %v1249, 0.0
        %v1266 = vsub.f32 %v1088, %v1138
        %v1267 = vsub.f32 %v1089, %v1139
        %v1268 = vsub.f32 %v1090, %v1140
        %v1269 = vsub.f32 %v1091, %v1141
        %v1270 = vsub.f32 %v1092, %v1142
        %v1271 = vsub.f32 %v1093, %v1143
        %v1272 = vsub.f32 %v1094, %v1144
        %v1273 = vsub.f32 %v1095, %v1145
        %v1274 = vsub.f32 %v1096, %v1146
        %v1275 = vsub.f32 %v1097, %v1147
        %v1276 = vsub.f32 %v1098, %v1148
        %v1277 = vsub.f32 %v1099, %v1149
        %v1278 = vsub.f32 %v1100, %v1150
        %v1279 = vsub.f32 %v1101, %v1151
        %v1280 = vsub.f32 %v1102, %v1152
        %v1281 = vsub.f32 %v1103, %v1153
        %v1282 = vadd.f32 %v1250, 1e-05
        %v1283 = vadd.f32 %v1251, 1e-05
        %v1284 = vadd.f32 %v1252, 1e-05
        %v1285 = vadd.f32 %v1253, 1e-05
        %v1286 = vadd.f32 %v1254, 1e-05
        %v1287 = vadd.f32 %v1255, 1e-05
        %v1288 = vadd.f32 %v1256, 1e-05
        %v1289 = vadd.f32 %v1257, 1e-05
        %v1290 = vadd.f32 %v1258, 1e-05
        %v1291 = vadd.f32 %v1259, 1e-05
        %v1292 = vadd.f32 %v1260, 1e-05
        %v1293 = vadd.f32 %v1261, 1e-05
        %v1294 = vadd.f32 %v1262, 1e-05
        %v1295 = vadd.f32 %v1263, 1e-05
        %v1296 = vadd.f32 %v1264, 1e-05
        %v1297 = vadd.f32 %v1265, 1e-05
        %v1298 = vrsqrt.pop %v1282
        %v1299 = vrsqrt.pop %v1283
        %v1300 = vrsqrt.pop %v1284
        %v1301 = vrsqrt.pop %v1285
        %v1302 = vrsqrt.pop %v1286
        %v1303 = vrsqrt.pop %v1287
        %v1304 = vrsqrt.pop %v1288
        %v1305 = vrsqrt.pop %v1289
        %v1306 = vrsqrt.pop %v1290
        %v1307 = vrsqrt.pop %v1291
        %v1308 = vrsqrt.pop %v1292
        %v1309 = vrsqrt.pop %v1293
        %v1310 = vrsqrt.pop %v1294
        %v1311 = vrsqrt.pop %v1295
        %v1312 = vrsqrt.pop %v1296
        %v1313 = vrsqrt.pop %v1297
        %v1314 = vmul.f32 %v1266, %v1298
        %v1315 = vmul.f32 %v1267, %v1299
        %v1316 = vmul.f32 %v1268, %v1300
        %v1317 = vmul.f32 %v1269, %v1301
        %v1318 = vmul.f32 %v1270, %v1302
        %v1319 = vmul.f32 %v1271, %v1303
        %v1320 = vmul.f32 %v1272, %v1304
        %v1321 = vmul.f32 %v1273, %v1305
        %v1322 = vmul.f32 %v1274, %v1306
        %v1323 = vmul.f32 %v1275, %v1307
        %v1324 = vmul.f32 %v1276, %v1308
        %v1325 = vmul.f32 %v1277, %v1309
        %v1326 = vmul.f32 %v1278, %v1310
        %v1327 = vmul.f32 %v1279, %v1311
        %v1328 = vmul.f32 %v1280, %v1312
        %v1329 = vmul.f32 %v1281, %v1313
        %v1331 = vlaneseq
        %v1332 = vshrl.u32 %v1331, 7
        %v1333 = vsub.s32 0, %v1332
        %v1334 = vrot.slane %v1104, %v1333
        %v1336 = vmul.f32 %v1314, %v1334
        %v1337 = vmul.f32 %v1315, %v1334
        %v1338 = vmul.f32 %v1316, %v1334
        %v1339 = vmul.f32 %v1317, %v1334
        %v1340 = vmul.f32 %v1318, %v1334
        %v1341 = vmul.f32 %v1319, %v1334
        %v1342 = vmul.f32 %v1320, %v1334
        %v1343 = vmul.f32 %v1321, %v1334
        %v1344 = vmul.f32 %v1322, %v1334
        %v1345 = vmul.f32 %v1323, %v1334
        %v1346 = vmul.f32 %v1324, %v1334
        %v1347 = vmul.f32 %v1325, %v1334
        %v1348 = vmul.f32 %v1326, %v1334
        %v1349 = vmul.f32 %v1327, %v1334
        %v1350 = vmul.f32 %v1328, %v1334
        %v1351 = vmul.f32 %v1329, %v1334
        %v1353 = vlaneseq
        %v1354 = vshrl.u32 %v1353, 7
        %v1355 = vsub.s32 0, %v1354
        %v1356 = vrot.slane %v1105, %v1355
        %v1358 = vadd.f32 %v1336, %v1356
        %v1359 = vadd.f32 %v1337, %v1356
        %v1360 = vadd.f32 %v1338, %v1356
        %v1361 = vadd.f32 %v1339, %v1356
        %v1362 = vadd.f32 %v1340, %v1356
        %v1363 = vadd.f32 %v1341, %v1356
        %v1364 = vadd.f32 %v1342, %v1356
        %v1365 = vadd.f32 %v1343, %v1356
        %v1366 = vadd.f32 %v1344, %v1356
        %v1367 = vadd.f32 %v1345, %v1356
        %v1368 = vadd.f32 %v1346, %v1356
        %v1369 = vadd.f32 %v1347, %v1356
        %v1370 = vadd.f32 %v1348, %v1356
        %v1371 = vadd.f32 %v1349, %v1356
        %v1372 = vadd.f32 %v1350, %v1356
        %v1373 = vadd.f32 %v1351, %v1356
        %v1374 = vpack.c.bf16 %v1359, %v1358
        %v1375 = vpack.c.bf16 %v1361, %v1360
        %v1376 = vpack.c.bf16 %v1363, %v1362
        %v1377 = vpack.c.bf16 %v1365, %v1364
        %v1378 = vpack.c.bf16 %v1367, %v1366
        %v1379 = vpack.c.bf16 %v1369, %v1368
        %v1380 = vpack.c.bf16 %v1371, %v1370
        %v1381 = vpack.c.bf16 %v1373, %v1372
        %v1382 = vld [vmem:[#allocation5] sm:$0xf]
        %v1383 = vld [vmem:[#allocation5 + $0x4] sm:$0xf]
        %v1384 = vld [vmem:[#allocation5 + $0x8] sm:$0xf]
        %v1385 = vld [vmem:[#allocation5 + $0xc] sm:$0xf]
        %v1386 = vld [vmem:[#allocation5 + $0x10] sm:$0xf]
        %v1387 = vld [vmem:[#allocation5 + $0x14] sm:$0xf]
        %v1388 = vld [vmem:[#allocation5 + $0x18] sm:$0xf]
        %v1389 = vld [vmem:[#allocation5 + $0x1c] sm:$0xf]
        %v1390 = vld [vmem:[#allocation5 + $0x20] sm:$0xf]
        %v1391 = vld [vmem:[#allocation5 + $0x24] sm:$0xf]
        %v1392 = vld [vmem:[#allocation5 + $0x28] sm:$0xf]
        %v1393 = vld [vmem:[#allocation5 + $0x2c] sm:$0xf]
        %v1394 = vld [vmem:[#allocation5 + $0x30] sm:$0xf]
        %v1395 = vld [vmem:[#allocation5 + $0x34] sm:$0xf]
        %v1396 = vld [vmem:[#allocation5 + $0x38] sm:$0xf]
        %v1397 = vld [vmem:[#allocation5 + $0x3c] sm:$0xf]
        %v1398 = vld [vmem:[%s4] sm:$0x1]
        %v1400 = vlaneseq
        %v1401 = vshrl.u32 %v1400, 7
        %v1402 = vsub.s32 0, %v1401
        %v1403 = vrot.slane %v1398, %v1402
        %v1421 = vunpack.c.l.b16 %v1382
        %v1422 = vunpack.c.l.b16 %v1383
        %v1423 = vunpack.c.l.b16 %v1384
        %v1424 = vunpack.c.l.b16 %v1385
        %v1425 = vunpack.c.l.b16 %v1386
        %v1426 = vunpack.c.l.b16 %v1387
        %v1427 = vunpack.c.l.b16 %v1388
        %v1428 = vunpack.c.l.b16 %v1389
        %v1429 = vunpack.c.l.b16 %v1390
        %v1430 = vunpack.c.l.b16 %v1391
        %v1431 = vunpack.c.l.b16 %v1392
        %v1432 = vunpack.c.l.b16 %v1393
        %v1433 = vunpack.c.l.b16 %v1394
        %v1434 = vunpack.c.l.b16 %v1395
        %v1435 = vunpack.c.l.b16 %v1396
        %v1436 = vunpack.c.l.b16 %v1397
        %v1437 = vpack.c.b16 %v1422, %v1421
        %v1438 = vpack.c.b16 %v1424, %v1423
        %v1439 = vpack.c.b16 %v1426, %v1425
        %v1440 = vpack.c.b16 %v1428, %v1427
        %v1441 = vpack.c.b16 %v1430, %v1429
        %v1442 = vpack.c.b16 %v1432, %v1431
        %v1443 = vpack.c.b16 %v1434, %v1433
        %v1444 = vpack.c.b16 %v1436, %v1435
        %1453 = vmatprep.subr.bf16.mxu0 0
        %1454 = vmatpush1.bf16.msra.mxu0 %v1437
        %1455 = vmatprep.subr.bf16.mxu0 0
        %1456 = vmatpush1.bf16.msra.mxu0 %v1438
        %1457 = vmatprep.subr.bf16.mxu0 0
        %1458 = vmatpush1.bf16.msra.mxu0 %v1439
        %1459 = vmatprep.subr.bf16.mxu0 0
        %1460 = vmatpush1.bf16.msra.mxu0 %v1440
        %1461 = vmatprep.subr.bf16.mxu0 0
        %1462 = vmatpush1.bf16.msra.mxu0 %v1441
        %1463 = vmatprep.subr.bf16.mxu0 0
        %1464 = vmatpush1.bf16.msra.mxu0 %v1442
        %1465 = vmatprep.subr.bf16.mxu0 0
        %1466 = vmatpush1.bf16.msra.mxu0 %v1443
        %1467 = vmatprep.subr.bf16.mxu0 0
        %1468 = vmatpush1.bf16.msra.mxu0 %v1444
        %1469 = vmatprep.subr.bf16.mxu0 0
        %1470 = vmatpush1.bf16.msra.mxu0 0
        %1471 = vmatprep.subr.bf16.mxu0 0
        %1472 = vmatpush1.bf16.msra.mxu0 0
        %1473 = vmatprep.subr.bf16.mxu0 0
        %1474 = vmatpush1.bf16.msra.mxu0 0
        %1475 = vmatprep.subr.bf16.mxu0 0
        %1476 = vmatpush1.bf16.msra.mxu0 0
        %1477 = vmatprep.subr.bf16.mxu0 0
        %1478 = vmatpush1.bf16.msra.mxu0 0
        %1479 = vmatprep.subr.bf16.mxu0 0
        %1480 = vmatpush1.bf16.msra.mxu0 0
        %1481 = vmatprep.subr.bf16.mxu0 0
        %1482 = vmatpush1.bf16.msra.mxu0 0
        %1483 = vmatprep.subr.bf16.mxu0 0
        %1484 = vmatpush1.bf16.msra.mxu0 0
        %1485 = vmatprep.mubr.bf16.mxu0 0
        %1486 = vmatmul.mubr.bf16.gmra.mrb[0].mxu0 %v848
        %v1487 = vpop.f32.mrb[0].mxu0
        %v1488 = vadd.f32 %v1403, %v1487
        %v1489 = vpop.f32.mrb[0].mxu0
        %v1490 = vpop.f32.mrb[0].mxu0
        %v1491 = vadd.f32 %v1403, %v1490
        %v1492 = vpop.f32.mrb[0].mxu0
        %1493 = vmatprep.mubr.bf16.mxu0 0
        %1494 = vmatmul.mubr.bf16.gmra.mrb[0].mxu0 %v849
        %v1495 = vpop.f32.mrb[0].mxu0
        %v1496 = vadd.f32 %v1403, %v1495
        %v1497 = vpop.f32.mrb[0].mxu0
        %v1498 = vpop.f32.mrb[0].mxu0
        %v1499 = vadd.f32 %v1403, %v1498
        %v1500 = vpop.f32.mrb[0].mxu0
        %1501 = vmatprep.mubr.bf16.mxu0 0
        %1502 = vmatmul.mubr.bf16.gmra.mrb[0].mxu0 %v850
        %v1503 = vpop.f32.mrb[0].mxu0
        %v1504 = vadd.f32 %v1403, %v1503
        %v1505 = vpop.f32.mrb[0].mxu0
        %v1506 = vpop.f32.mrb[0].mxu0
        %v1507 = vadd.f32 %v1403, %v1506
        %v1508 = vpop.f32.mrb[0].mxu0
        %1509 = vmatprep.mubr.bf16.mxu0 0
        %1510 = vmatmul.mubr.bf16.gmra.mrb[0].mxu0 %v851
        %v1511 = vpop.f32.mrb[0].mxu0
        %v1512 = vadd.f32 %v1403, %v1511
        %v1513 = vpop.f32.mrb[0].mxu0
        %v1514 = vpop.f32.mrb[0].mxu0
        %v1515 = vadd.f32 %v1403, %v1514
        %v1516 = vpop.f32.mrb[0].mxu0
        %1517 = vmatprep.mubr.bf16.mxu0 0
        %1518 = vmatmul.mubr.bf16.gmra.mrb[0].mxu0 %v852
        %v1519 = vpop.f32.mrb[0].mxu0
        %v1520 = vadd.f32 %v1403, %v1519
        %v1521 = vpop.f32.mrb[0].mxu0
        %v1522 = vpop.f32.mrb[0].mxu0
        %v1523 = vadd.f32 %v1403, %v1522
        %v1524 = vpop.f32.mrb[0].mxu0
        %1525 = vmatprep.mubr.bf16.mxu0 0
        %1526 = vmatmul.mubr.bf16.gmra.mrb[0].mxu0 %v853
        %v1527 = vpop.f32.mrb[0].mxu0
        %v1528 = vadd.f32 %v1403, %v1527
        %v1529 = vpop.f32.mrb[0].mxu0
        %v1530 = vpop.f32.mrb[0].mxu0
        %v1531 = vadd.f32 %v1403, %v1530
        %v1532 = vpop.f32.mrb[0].mxu0
        %1533 = vmatprep.mubr.bf16.mxu0 0
        %1534 = vmatmul.mubr.bf16.gmra.mrb[0].mxu0 %v854
        %v1535 = vpop.f32.mrb[0].mxu0
        %v1536 = vadd.f32 %v1403, %v1535
        %v1537 = vpop.f32.mrb[0].mxu0
        %v1538 = vpop.f32.mrb[0].mxu0
        %v1539 = vadd.f32 %v1403, %v1538
        %v1540 = vpop.f32.mrb[0].mxu0
        %1541 = vmatprep.mubr.bf16.mxu0 0
        %1542 = vmatmul.mubr.bf16.gmra.mrb[0].mxu0 %v855
        %v1543 = vpop.f32.mrb[0].mxu0
        %v1544 = vadd.f32 %v1403, %v1543
        %v1545 = vpop.f32.mrb[0].mxu0
        %v1546 = vpop.f32.mrb[0].mxu0
        %v1547 = vadd.f32 %v1403, %v1546
        %v1548 = vpop.f32.mrb[0].mxu0
        %1549 = vdwg.mxu0
        %v1550 = vmul.f32 %v1488, 0.5
        %v1551 = vmul.f32 %v1491, 0.5
        %v1552 = vmul.f32 %v1496, 0.5
        %v1553 = vmul.f32 %v1499, 0.5
        %v1554 = vmul.f32 %v1504, 0.5
        %v1555 = vmul.f32 %v1507, 0.5
        %v1556 = vmul.f32 %v1512, 0.5
        %v1557 = vmul.f32 %v1515, 0.5
        %v1558 = vmul.f32 %v1520, 0.5
        %v1559 = vmul.f32 %v1523, 0.5
        %v1560 = vmul.f32 %v1528, 0.5
        %v1561 = vmul.f32 %v1531, 0.5
        %v1562 = vmul.f32 %v1536, 0.5
        %v1563 = vmul.f32 %v1539, 0.5
        %v1564 = vmul.f32 %v1544, 0.5
        %v1565 = vmul.f32 %v1547, 0.5
        %v1566 = vmul.f32 %v1488, 0.70710677
        %v1567 = vmul.f32 %v1491, 0.70710677
        %v1568 = vmul.f32 %v1496, 0.70710677
        %v1569 = vmul.f32 %v1499, 0.70710677
        %v1570 = vmul.f32 %v1504, 0.70710677
        %v1571 = vmul.f32 %v1507, 0.70710677
        %v1572 = vmul.f32 %v1512, 0.70710677
        %v1573 = vmul.f32 %v1515, 0.70710677
        %v1574 = vmul.f32 %v1520, 0.70710677
        %v1575 = vmul.f32 %v1523, 0.70710677
        %v1576 = vmul.f32 %v1528, 0.70710677
        %v1577 = vmul.f32 %v1531, 0.70710677
        %v1578 = vmul.f32 %v1536, 0.70710677
        %v1579 = vmul.f32 %v1539, 0.70710677
        %v1580 = vmul.f32 %v1544, 0.70710677
        %v1581 = vmul.f32 %v1547, 0.70710677
        %v1582 = verf.f32.pop %v1566
        %v1583 = verf.f32.pop %v1567
        %v1584 = verf.f32.pop %v1568
        %v1585 = verf.f32.pop %v1569
        %v1586 = verf.f32.pop %v1570
        %v1587 = verf.f32.pop %v1571
        %v1588 = verf.f32.pop %v1572
        %v1589 = verf.f32.pop %v1573
        %v1590 = verf.f32.pop %v1574
        %v1591 = verf.f32.pop %v1575
        %v1592 = verf.f32.pop %v1576
        %v1593 = verf.f32.pop %v1577
        %v1594 = verf.f32.pop %v1578
        %v1595 = verf.f32.pop %v1579
        %v1596 = verf.f32.pop %v1580
        %v1597 = verf.f32.pop %v1581
        %v1598 = vadd.f32 %v1582, 1.0
        %v1599 = vadd.f32 %v1583, 1.0
        %v1600 = vadd.f32 %v1584, 1.0
        %v1601 = vadd.f32 %v1585, 1.0
        %v1602 = vadd.f32 %v1586, 1.0
        %v1603 = vadd.f32 %v1587, 1.0
        %v1604 = vadd.f32 %v1588, 1.0
        %v1605 = vadd.f32 %v1589, 1.0
        %v1606 = vadd.f32 %v1590, 1.0
        %v1607 = vadd.f32 %v1591, 1.0
        %v1608 = vadd.f32 %v1592, 1.0
        %v1609 = vadd.f32 %v1593, 1.0
        %v1610 = vadd.f32 %v1594, 1.0
        %v1611 = vadd.f32 %v1595, 1.0
        %v1612 = vadd.f32 %v1596, 1.0
        %v1613 = vadd.f32 %v1597, 1.0
        %v1614 = vmul.f32 %v1550, %v1598
        %v1615 = vmul.f32 %v1551, %v1599
        %v1616 = vmul.f32 %v1552, %v1600
        %v1617 = vmul.f32 %v1553, %v1601
        %v1618 = vmul.f32 %v1554, %v1602
        %v1619 = vmul.f32 %v1555, %v1603
        %v1620 = vmul.f32 %v1556, %v1604
        %v1621 = vmul.f32 %v1557, %v1605
        %v1622 = vmul.f32 %v1558, %v1606
        %v1623 = vmul.f32 %v1559, %v1607
        %v1624 = vmul.f32 %v1560, %v1608
        %v1625 = vmul.f32 %v1561, %v1609
        %v1626 = vmul.f32 %v1562, %v1610
        %v1627 = vmul.f32 %v1563, %v1611
        %v1628 = vmul.f32 %v1564, %v1612
        %v1629 = vmul.f32 %v1565, %v1613
        %v1630 = vpack.c.bf16 %v1615, %v1614
        %v1631 = vpack.c.bf16 %v1617, %v1616
        %v1632 = vpack.c.bf16 %v1619, %v1618
        %v1633 = vpack.c.bf16 %v1621, %v1620
        %v1634 = vpack.c.bf16 %v1623, %v1622
        %v1635 = vpack.c.bf16 %v1625, %v1624
        %v1636 = vpack.c.bf16 %v1627, %v1626
        %v1637 = vpack.c.bf16 %v1629, %v1628
        %v1638 = vld [vmem:[%s9] sm:$0xf]
        %v1639 = vld [vmem:[%s9 + $0x4] sm:$0xf]
        %v1640 = vld [vmem:[%s10] sm:$0xff]
        %v1641 = vld [vmem:[%s10 + $0x8] sm:$0xff]
        %1643 = vset.pattern.permute.xlu0 0
        %1644 = vperm.xlu0 %1643, %v1640
        %v1645 = vpop.permute.xlu0 %1644
        %1648 = vset.pattern.permute.xlu0 0
        %1649 = vperm.xlu0 %1648, %v1641
        %v1650 = vpop.permute.xlu0 %1649
        %v1654 = vunpack.c.l.b16 %v1638
        %v1655 = vunpack.c.l.b16 %v1639
        %v1656 = vpack.c.b16 %v1655, %v1654
        %vm1657 = vcmask 130048
        %v1659 = vsel %vm1657, %v1656, 0
        %1661 = vmatprep.subr.bf16.mxu0 %v1375
        %1662 = vmatpush1.bf16.msra.mxu0 %v1374
        %1663 = vmatprep.subr.bf16.mxu0 0
        %1664 = vmatpush1.bf16.msra.mxu0 0
        %1665 = vmatprep.subr.bf16.mxu0 0
        %1666 = vmatpush1.bf16.msra.mxu0 0
        %1667 = vmatprep.subr.bf16.mxu0 0
        %1668 = vmatpush1.bf16.msra.mxu0 0
        %1669 = vmatprep.subr.bf16.mxu0 0
        %1670 = vmatpush1.bf16.msra.mxu0 0
        %1671 = vmatprep.subr.bf16.mxu0 0
        %1672 = vmatpush1.bf16.msra.mxu0 0
        %1673 = vmatprep.subr.bf16.mxu0 0
        %1674 = vmatpush1.bf16.msra.mxu0 0
        %1675 = vmatprep.subr.bf16.mxu0 0
        %1676 = vmatpush1.bf16.msra.mxu0 0
        %1677 = vmatprep.subr.bf16.mxu0 0
        %1678 = vmatpush1.bf16.msra.mxu0 0
        %1679 = vmatprep.subr.bf16.mxu0 0
        %1680 = vmatpush1.bf16.msra.mxu0 0
        %1681 = vmatprep.subr.bf16.mxu0 0
        %1682 = vmatpush1.bf16.msra.mxu0 0
        %1683 = vmatprep.subr.bf16.mxu0 0
        %1684 = vmatpush1.bf16.msra.mxu0 0
        %1685 = vmatprep.subr.bf16.mxu0 0
        %1686 = vmatpush1.bf16.msra.mxu0 0
        %1687 = vmatprep.subr.bf16.mxu0 0
        %1688 = vmatpush1.bf16.msra.mxu0 0
        %1689 = vmatprep.subr.bf16.mxu0 0
        %1690 = vmatpush1.bf16.msra.mxu0 0
        %1691 = vmatprep.subr.bf16.mxu0 0
        %1692 = vmatpush1.bf16.msra.mxu0 0
        %1693 = vmatprep.mubr.bf16.mxu0 0
        %1694 = vmatmul.mubr.bf16.gmra.mrb[0].mxu0 %v1659
        %v1695 = vpop.f32.mrb[0].mxu0
        %v1696 = vadd.f32 %v1645, %v1695
        %v1697 = vpop.f32.mrb[0].mxu0
        %v1698 = vadd.f32 %v1645, %v1697
        %v1699 = vpop.f32.mrb[0].mxu0
        %v1700 = vadd.f32 %v1650, %v1699
        %v1701 = vpop.f32.mrb[0].mxu0
        %v1702 = vadd.f32 %v1650, %v1701
        %1703 = vdwg.mxu0
        %1704 = vmatprep.subr.bf16.mxu0 %v1377
        %1705 = vmatpush1.bf16.msra.mxu0 %v1376
        %1706 = vmatprep.subr.bf16.mxu0 0
        %1707 = vmatpush1.bf16.msra.mxu0 0
        %1708 = vmatprep.subr.bf16.mxu0 0
        %1709 = vmatpush1.bf16.msra.mxu0 0
        %1710 = vmatprep.subr.bf16.mxu0 0
        %1711 = vmatpush1.bf16.msra.mxu0 0
        %1712 = vmatprep.subr.bf16.mxu0 0
        %1713 = vmatpush1.bf16.msra.mxu0 0
        %1714 = vmatprep.subr.bf16.mxu0 0
        %1715 = vmatpush1.bf16.msra.mxu0 0
        %1716 = vmatprep.subr.bf16.mxu0 0
        %1717 = vmatpush1.bf16.msra.mxu0 0
        %1718 = vmatprep.subr.bf16.mxu0 0
        %1719 = vmatpush1.bf16.msra.mxu0 0
        %1720 = vmatprep.subr.bf16.mxu0 0
        %1721 = vmatpush1.bf16.msra.mxu0 0
        %1722 = vmatprep.subr.bf16.mxu0 0
        %1723 = vmatpush1.bf16.msra.mxu0 0
        %1724 = vmatprep.subr.bf16.mxu0 0
        %1725 = vmatpush1.bf16.msra.mxu0 0
        %1726 = vmatprep.subr.bf16.mxu0 0
        %1727 = vmatpush1.bf16.msra.mxu0 0
        %1728 = vmatprep.subr.bf16.mxu0 0
        %1729 = vmatpush1.bf16.msra.mxu0 0
        %1730 = vmatprep.subr.bf16.mxu0 0
        %1731 = vmatpush1.bf16.msra.mxu0 0
        %1732 = vmatprep.subr.bf16.mxu0 0
        %1733 = vmatpush1.bf16.msra.mxu0 0
        %1734 = vmatprep.subr.bf16.mxu0 0
        %1735 = vmatpush1.bf16.msra.mxu0 0
        %1736 = vmatprep.mubr.bf16.mxu0 0
        %1737 = vmatmul.mubr.bf16.gmra.mrb[0].mxu0 %v1659
        %v1738 = vpop.f32.mrb[0].mxu0
        %v1739 = vadd.f32 %v1645, %v1738
        %v1740 = vpop.f32.mrb[0].mxu0
        %v1741 = vadd.f32 %v1645, %v1740
        %v1742 = vpop.f32.mrb[0].mxu0
        %v1743 = vadd.f32 %v1650, %v1742
        %v1744 = vpop.f32.mrb[0].mxu0
        %v1745 = vadd.f32 %v1650, %v1744
        %1746 = vdwg.mxu0
        %1747 = vmatprep.subr.bf16.mxu0 %v1379
        %1748 = vmatpush1.bf16.msra.mxu0 %v1378
        %1749 = vmatprep.subr.bf16.mxu0 0
        %1750 = vmatpush1.bf16.msra.mxu0 0
        %1751 = vmatprep.subr.bf16.mxu0 0
        %1752 = vmatpush1.bf16.msra.mxu0 0
        %1753 = vmatprep.subr.bf16.mxu0 0
        %1754 = vmatpush1.bf16.msra.mxu0 0
        %1755 = vmatprep.subr.bf16.mxu0 0
        %1756 = vmatpush1.bf16.msra.mxu0 0
        %1757 = vmatprep.subr.bf16.mxu0 0
        %1758 = vmatpush1.bf16.msra.mxu0 0
        %1759 = vmatprep.subr.bf16.mxu0 0
        %1760 = vmatpush1.bf16.msra.mxu0 0
        %1761 = vmatprep.subr.bf16.mxu0 0
        %1762 = vmatpush1.bf16.msra.mxu0 0
        %1763 = vmatprep.subr.bf16.mxu0 0
        %1764 = vmatpush1.bf16.msra.mxu0 0
        %1765 = vmatprep.subr.bf16.mxu0 0
        %1766 = vmatpush1.bf16.msra.mxu0 0
        %1767 = vmatprep.subr.bf16.mxu0 0
        %1768 = vmatpush1.bf16.msra.mxu0 0
        %1769 = vmatprep.subr.bf16.mxu0 0
        %1770 = vmatpush1.bf16.msra.mxu0 0
        %1771 = vmatprep.subr.bf16.mxu0 0
        %1772 = vmatpush1.bf16.msra.mxu0 0
        %1773 = vmatprep.subr.bf16.mxu0 0
        %1774 = vmatpush1.bf16.msra.mxu0 0
        %1775 = vmatprep.subr.bf16.mxu0 0
        %1776 = vmatpush1.bf16.msra.mxu0 0
        %1777 = vmatprep.subr.bf16.mxu0 0
        %1778 = vmatpush1.bf16.msra.mxu0 0
        %1779 = vmatprep.mubr.bf16.mxu0 0
        %1780 = vmatmul.mubr.bf16.gmra.mrb[0].mxu0 %v1659
        %v1781 = vpop.f32.mrb[0].mxu0
        %v1782 = vadd.f32 %v1645, %v1781
        %v1783 = vpop.f32.mrb[0].mxu0
        %v1784 = vadd.f32 %v1645, %v1783
        %v1785 = vpop.f32.mrb[0].mxu0
        %v1786 = vadd.f32 %v1650, %v1785
        %v1787 = vpop.f32.mrb[0].mxu0
        %v1788 = vadd.f32 %v1650, %v1787
        %1789 = vdwg.mxu0
        %1790 = vmatprep.subr.bf16.mxu0 %v1381
        %1791 = vmatpush1.bf16.msra.mxu0 %v1380
        %1792 = vmatprep.subr.bf16.mxu0 0
        %1793 = vmatpush1.bf16.msra.mxu0 0
        %1794 = vmatprep.subr.bf16.mxu0 0
        %1795 = vmatpush1.bf16.msra.mxu0 0
        %1796 = vmatprep.subr.bf16.mxu0 0
        %1797 = vmatpush1.bf16.msra.mxu0 0
        %1798 = vmatprep.subr.bf16.mxu0 0
        %1799 = vmatpush1.bf16.msra.mxu0 0
        %1800 = vmatprep.subr.bf16.mxu0 0
        %1801 = vmatpush1.bf16.msra.mxu0 0
        %1802 = vmatprep.subr.bf16.mxu0 0
        %1803 = vmatpush1.bf16.msra.mxu0 0
        %1804 = vmatprep.subr.bf16.mxu0 0
        %1805 = vmatpush1.bf16.msra.mxu0 0
        %1806 = vmatprep.subr.bf16.mxu0 0
        %1807 = vmatpush1.bf16.msra.mxu0 0
        %1808 = vmatprep.subr.bf16.mxu0 0
        %1809 = vmatpush1.bf16.msra.mxu0 0
        %1810 = vmatprep.subr.bf16.mxu0 0
        %1811 = vmatpush1.bf16.msra.mxu0 0
        %1812 = vmatprep.subr.bf16.mxu0 0
        %1813 = vmatpush1.bf16.msra.mxu0 0
        %1814 = vmatprep.subr.bf16.mxu0 0
        %1815 = vmatpush1.bf16.msra.mxu0 0
        %1816 = vmatprep.subr.bf16.mxu0 0
        %1817 = vmatpush1.bf16.msra.mxu0 0
        %1818 = vmatprep.subr.bf16.mxu0 0
        %1819 = vmatpush1.bf16.msra.mxu0 0
        %1820 = vmatprep.subr.bf16.mxu0 0
        %1821 = vmatpush1.bf16.msra.mxu0 0
        %1822 = vmatprep.mubr.bf16.mxu0 0
        %1823 = vmatmul.mubr.bf16.gmra.mrb[0].mxu0 %v1659
        %v1824 = vpop.f32.mrb[0].mxu0
        %v1825 = vadd.f32 %v1645, %v1824
        %v1826 = vpop.f32.mrb[0].mxu0
        %v1827 = vadd.f32 %v1645, %v1826
        %v1828 = vpop.f32.mrb[0].mxu0
        %v1829 = vadd.f32 %v1650, %v1828
        %v1830 = vpop.f32.mrb[0].mxu0
        %v1831 = vadd.f32 %v1650, %v1830
        %1832 = vdwg.mxu0
        %v1833 = vpack.c.bf16 %v1700, %v1696
        %v1834 = vpack.c.bf16 %v1702, %v1698
        %v1835 = vpack.c.bf16 %v1743, %v1739
        %v1836 = vpack.c.bf16 %v1745, %v1741
        %v1837 = vpack.c.bf16 %v1786, %v1782
        %v1838 = vpack.c.bf16 %v1788, %v1784
        %v1839 = vpack.c.bf16 %v1829, %v1825
        %v1840 = vpack.c.bf16 %v1831, %v1827
        %v1841 = vmul.bf16 %v1630, %v1833
        %v1842 = vmul.bf16 %v1631, %v1834
        %v1843 = vmul.bf16 %v1632, %v1835
        %v1844 = vmul.bf16 %v1633, %v1836
        %v1845 = vmul.bf16 %v1634, %v1837
        %v1846 = vmul.bf16 %v1635, %v1838
        %v1847 = vmul.bf16 %v1636, %v1839
        %v1848 = vmul.bf16 %v1637, %v1840
        %v1849 = vld [vmem:[#allocation8] sm:$0xf]
        %v1850 = vld [vmem:[#allocation8 + $0x4] sm:$0xf]
        %v1851 = vld [vmem:[#allocation8 + $0x8] sm:$0xf]
        %v1852 = vld [vmem:[#allocation8 + $0xc] sm:$0xf]
        %v1853 = vld [vmem:[#allocation8 + $0x10] sm:$0xf]
        %v1854 = vld [vmem:[#allocation8 + $0x14] sm:$0xf]
        %v1855 = vld [vmem:[#allocation8 + $0x18] sm:$0xf]
        %v1856 = vld [vmem:[#allocation8 + $0x1c] sm:$0xf]
        %v1857 = vld [vmem:[#allocation8 + $0x20] sm:$0xf]
        %v1858 = vld [vmem:[#allocation8 + $0x24] sm:$0xf]
        %v1859 = vld [vmem:[#allocation8 + $0x28] sm:$0xf]
        %v1860 = vld [vmem:[#allocation8 + $0x2c] sm:$0xf]
        %v1861 = vld [vmem:[#allocation8 + $0x30] sm:$0xf]
        %v1862 = vld [vmem:[#allocation8 + $0x34] sm:$0xf]
        %v1863 = vld [vmem:[#allocation8 + $0x38] sm:$0xf]
        %v1864 = vld [vmem:[#allocation8 + $0x3c] sm:$0xf]
        %v1865 = vld [vmem:[%s12] sm:$0x1]
        %v1867 = vlaneseq
        %v1868 = vshrl.u32 %v1867, 7
        %v1869 = vsub.s32 0, %v1868
        %v1870 = vrot.slane %v1865, %v1869
        %v1888 = vunpack.c.l.b16 %v1849
        %v1889 = vunpack.c.l.b16 %v1850
        %v1890 = vunpack.c.l.b16 %v1851
        %v1891 = vunpack.c.l.b16 %v1852
        %v1892 = vunpack.c.l.b16 %v1853
        %v1893 = vunpack.c.l.b16 %v1854
        %v1894 = vunpack.c.l.b16 %v1855
        %v1895 = vunpack.c.l.b16 %v1856
        %v1896 = vunpack.c.l.b16 %v1857
        %v1897 = vunpack.c.l.b16 %v1858
        %v1898 = vunpack.c.l.b16 %v1859
        %v1899 = vunpack.c.l.b16 %v1860
        %v1900 = vunpack.c.l.b16 %v1861
        %v1901 = vunpack.c.l.b16 %v1862
        %v1902 = vunpack.c.l.b16 %v1863
        %v1903 = vunpack.c.l.b16 %v1864
        %v1904 = vpack.c.b16 %v1889, %v1888
        %v1905 = vpack.c.b16 %v1891, %v1890
        %v1906 = vpack.c.b16 %v1893, %v1892
        %v1907 = vpack.c.b16 %v1895, %v1894
        %v1908 = vpack.c.b16 %v1897, %v1896
        %v1909 = vpack.c.b16 %v1899, %v1898
        %v1910 = vpack.c.b16 %v1901, %v1900
        %v1911 = vpack.c.b16 %v1903, %v1902
        %1920 = vmatprep.subr.bf16.mxu0 0
        %1921 = vmatpush1.bf16.msra.mxu0 %v1904
        %1922 = vmatprep.subr.bf16.mxu0 0
        %1923 = vmatpush1.bf16.msra.mxu0 %v1905
        %1924 = vmatprep.subr.bf16.mxu0 0
        %1925 = vmatpush1.bf16.msra.mxu0 %v1906
        %1926 = vmatprep.subr.bf16.mxu0 0
        %1927 = vmatpush1.bf16.msra.mxu0 %v1907
        %1928 = vmatprep.subr.bf16.mxu0 0
        %1929 = vmatpush1.bf16.msra.mxu0 %v1908
        %1930 = vmatprep.subr.bf16.mxu0 0
        %1931 = vmatpush1.bf16.msra.mxu0 %v1909
        %1932 = vmatprep.subr.bf16.mxu0 0
        %1933 = vmatpush1.bf16.msra.mxu0 %v1910
        %1934 = vmatprep.subr.bf16.mxu0 0
        %1935 = vmatpush1.bf16.msra.mxu0 %v1911
        %1936 = vmatprep.subr.bf16.mxu0 0
        %1937 = vmatpush1.bf16.msra.mxu0 0
        %1938 = vmatprep.subr.bf16.mxu0 0
        %1939 = vmatpush1.bf16.msra.mxu0 0
        %1940 = vmatprep.subr.bf16.mxu0 0
        %1941 = vmatpush1.bf16.msra.mxu0 0
        %1942 = vmatprep.subr.bf16.mxu0 0
        %1943 = vmatpush1.bf16.msra.mxu0 0
        %1944 = vmatprep.subr.bf16.mxu0 0
        %1945 = vmatpush1.bf16.msra.mxu0 0
        %1946 = vmatprep.subr.bf16.mxu0 0
        %1947 = vmatpush1.bf16.msra.mxu0 0
        %1948 = vmatprep.subr.bf16.mxu0 0
        %1949 = vmatpush1.bf16.msra.mxu0 0
        %1950 = vmatprep.subr.bf16.mxu0 0
        %1951 = vmatpush1.bf16.msra.mxu0 0
        %1952 = vmatprep.mubr.bf16.mxu0 0
        %1953 = vmatmul.mubr.bf16.gmra.mrb[0].mxu0 %v1841
        %v1954 = vpop.f32.mrb[0].mxu0
        %v1955 = vadd.f32 %v1870, %v1954
        %v1956 = vpop.f32.mrb[0].mxu0
        %v1957 = vpop.f32.mrb[0].mxu0
        %v1958 = vadd.f32 %v1870, %v1957
        %v1959 = vpop.f32.mrb[0].mxu0
        %1960 = vmatprep.mubr.bf16.mxu0 0
        %1961 = vmatmul.mubr.bf16.gmra.mrb[0].mxu0 %v1842
        %v1962 = vpop.f32.mrb[0].mxu0
        %v1963 = vadd.f32 %v1870, %v1962
        %v1964 = vpop.f32.mrb[0].mxu0
        %v1965 = vpop.f32.mrb[0].mxu0
        %v1966 = vadd.f32 %v1870, %v1965
        %v1967 = vpop.f32.mrb[0].mxu0
        %1968 = vmatprep.mubr.bf16.mxu0 0
        %1969 = vmatmul.mubr.bf16.gmra.mrb[0].mxu0 %v1843
        %v1970 = vpop.f32.mrb[0].mxu0
        %v1971 = vadd.f32 %v1870, %v1970
        %v1972 = vpop.f32.mrb[0].mxu0
        %v1973 = vpop.f32.mrb[0].mxu0
        %v1974 = vadd.f32 %v1870, %v1973
        %v1975 = vpop.f32.mrb[0].mxu0
        %1976 = vmatprep.mubr.bf16.mxu0 0
        %1977 = vmatmul.mubr.bf16.gmra.mrb[0].mxu0 %v1844
        %v1978 = vpop.f32.mrb[0].mxu0
        %v1979 = vadd.f32 %v1870, %v1978
        %v1980 = vpop.f32.mrb[0].mxu0
        %v1981 = vpop.f32.mrb[0].mxu0
        %v1982 = vadd.f32 %v1870, %v1981
        %v1983 = vpop.f32.mrb[0].mxu0
        %1984 = vmatprep.mubr.bf16.mxu0 0
        %1985 = vmatmul.mubr.bf16.gmra.mrb[0].mxu0 %v1845
        %v1986 = vpop.f32.mrb[0].mxu0
        %v1987 = vadd.f32 %v1870, %v1986
        %v1988 = vpop.f32.mrb[0].mxu0
        %v1989 = vpop.f32.mrb[0].mxu0
        %v1990 = vadd.f32 %v1870, %v1989
        %v1991 = vpop.f32.mrb[0].mxu0
        %1992 = vmatprep.mubr.bf16.mxu0 0
        %1993 = vmatmul.mubr.bf16.gmra.mrb[0].mxu0 %v1846
        %v1994 = vpop.f32.mrb[0].mxu0
        %v1995 = vadd.f32 %v1870, %v1994
        %v1996 = vpop.f32.mrb[0].mxu0
        %v1997 = vpop.f32.mrb[0].mxu0
        %v1998 = vadd.f32 %v1870, %v1997
        %v1999 = vpop.f32.mrb[0].mxu0
        %2000 = vmatprep.mubr.bf16.mxu0 0
        %2001 = vmatmul.mubr.bf16.gmra.mrb[0].mxu0 %v1847
        %v2002 = vpop.f32.mrb[0].mxu0
        %v2003 = vadd.f32 %v1870, %v2002
        %v2004 = vpop.f32.mrb[0].mxu0
        %v2005 = vpop.f32.mrb[0].mxu0
        %v2006 = vadd.f32 %v1870, %v2005
        %v2007 = vpop.f32.mrb[0].mxu0
        %2008 = vmatprep.mubr.bf16.mxu0 0
        %2009 = vmatmul.mubr.bf16.gmra.mrb[0].mxu0 %v1848
        %v2010 = vpop.f32.mrb[0].mxu0
        %v2011 = vadd.f32 %v1870, %v2010
        %v2012 = vpop.f32.mrb[0].mxu0
        %v2013 = vpop.f32.mrb[0].mxu0
        %v2014 = vadd.f32 %v1870, %v2013
        %v2015 = vpop.f32.mrb[0].mxu0
        %2016 = vdwg.mxu0
        %v2017 = vld [vmem:[%s13] sm:$0x1]
        %v2018 = vld [vmem:[%s14] sm:$0x1]
        %2019 = vadd.xlane.f32.xlu0 %v1955
        %v2020 = vpop.xlane.xlu0 %2019
        %2021 = vadd.xlane.f32.xlu0 %v1958
        %v2022 = vpop.xlane.xlu0 %2021
        %2023 = vadd.xlane.f32.xlu0 %v1963
        %v2024 = vpop.xlane.xlu0 %2023
        %2025 = vadd.xlane.f32.xlu0 %v1966
        %v2026 = vpop.xlane.xlu0 %2025
        %2027 = vadd.xlane.f32.xlu0 %v1971
        %v2028 = vpop.xlane.xlu0 %2027
        %2029 = vadd.xlane.f32.xlu0 %v1974
        %v2030 = vpop.xlane.xlu0 %2029
        %2031 = vadd.xlane.f32.xlu0 %v1979
        %v2032 = vpop.xlane.xlu0 %2031
        %2033 = vadd.xlane.f32.xlu0 %v1982
        %v2034 = vpop.xlane.xlu0 %2033
        %2035 = vadd.xlane.f32.xlu0 %v1987
        %v2036 = vpop.xlane.xlu0 %2035
        %2037 = vadd.xlane.f32.xlu0 %v1990
        %v2038 = vpop.xlane.xlu0 %2037
        %2039 = vadd.xlane.f32.xlu0 %v1995
        %v2040 = vpop.xlane.xlu0 %2039
        %2041 = vadd.xlane.f32.xlu0 %v1998
        %v2042 = vpop.xlane.xlu0 %2041
        %2043 = vadd.xlane.f32.xlu0 %v2003
        %v2044 = vpop.xlane.xlu0 %2043
        %2045 = vadd.xlane.f32.xlu0 %v2006
        %v2046 = vpop.xlane.xlu0 %2045
        %2047 = vadd.xlane.f32.xlu0 %v2011
        %v2048 = vpop.xlane.xlu0 %2047
        %2049 = vadd.xlane.f32.xlu0 %v2014
        %v2050 = vpop.xlane.xlu0 %2049
        %v2051 = vmul.f32 %v2020, %v609
        %v2052 = vmul.f32 %v2022, %v609
        %v2053 = vmul.f32 %v2024, %v609
        %v2054 = vmul.f32 %v2026, %v609
        %v2055 = vmul.f32 %v2028, %v609
        %v2056 = vmul.f32 %v2030, %v609
        %v2057 = vmul.f32 %v2032, %v609
        %v2058 = vmul.f32 %v2034, %v609
        %v2059 = vmul.f32 %v2036, %v609
        %v2060 = vmul.f32 %v2038, %v609
        %v2061 = vmul.f32 %v2040, %v609
        %v2062 = vmul.f32 %v2042, %v609
        %v2063 = vmul.f32 %v2044, %v609
        %v2064 = vmul.f32 %v2046, %v609
        %v2065 = vmul.f32 %v2048, %v609
        %v2066 = vmul.f32 %v2050, %v609
        %v2067 = vmul.f32 %v1955, %v1955
        %v2068 = vmul.f32 %v1958, %v1958
        %v2069 = vmul.f32 %v1963, %v1963
        %v2070 = vmul.f32 %v1966, %v1966
        %v2071 = vmul.f32 %v1971, %v1971
        %v2072 = vmul.f32 %v1974, %v1974
        %v2073 = vmul.f32 %v1979, %v1979
        %v2074 = vmul.f32 %v1982, %v1982
        %v2075 = vmul.f32 %v1987, %v1987
        %v2076 = vmul.f32 %v1990, %v1990
        %v2077 = vmul.f32 %v1995, %v1995
        %v2078 = vmul.f32 %v1998, %v1998
        %v2079 = vmul.f32 %v2003, %v2003
        %v2080 = vmul.f32 %v2006, %v2006
        %v2081 = vmul.f32 %v2011, %v2011
        %v2082 = vmul.f32 %v2014, %v2014
        %2083 = vadd.xlane.f32.xlu0 %v2067
        %v2084 = vpop.xlane.xlu0 %2083
        %2085 = vadd.xlane.f32.xlu0 %v2068
        %v2086 = vpop.xlane.xlu0 %2085
        %2087 = vadd.xlane.f32.xlu0 %v2069
        %v2088 = vpop.xlane.xlu0 %2087
        %2089 = vadd.xlane.f32.xlu0 %v2070
        %v2090 = vpop.xlane.xlu0 %2089
        %2091 = vadd.xlane.f32.xlu0 %v2071
        %v2092 = vpop.xlane.xlu0 %2091
        %2093 = vadd.xlane.f32.xlu0 %v2072
        %v2094 = vpop.xlane.xlu0 %2093
        %2095 = vadd.xlane.f32.xlu0 %v2073
        %v2096 = vpop.xlane.xlu0 %2095
        %2097 = vadd.xlane.f32.xlu0 %v2074
        %v2098 = vpop.xlane.xlu0 %2097
        %2099 = vadd.xlane.f32.xlu0 %v2075
        %v2100 = vpop.xlane.xlu0 %2099
        %2101 = vadd.xlane.f32.xlu0 %v2076
        %v2102 = vpop.xlane.xlu0 %2101
        %2103 = vadd.xlane.f32.xlu0 %v2077
        %v2104 = vpop.xlane.xlu0 %2103
        %2105 = vadd.xlane.f32.xlu0 %v2078
        %v2106 = vpop.xlane.xlu0 %2105
        %2107 = vadd.xlane.f32.xlu0 %v2079
        %v2108 = vpop.xlane.xlu0 %2107
        %2109 = vadd.xlane.f32.xlu0 %v2080
        %v2110 = vpop.xlane.xlu0 %2109
        %2111 = vadd.xlane.f32.xlu0 %v2081
        %v2112 = vpop.xlane.xlu0 %2111
        %2113 = vadd.xlane.f32.xlu0 %v2082
        %v2114 = vpop.xlane.xlu0 %2113
        %v2115 = vmul.f32 %v2084, %v609
        %v2116 = vmul.f32 %v2086, %v609
        %v2117 = vmul.f32 %v2088, %v609
        %v2118 = vmul.f32 %v2090, %v609
        %v2119 = vmul.f32 %v2092, %v609
        %v2120 = vmul.f32 %v2094, %v609
        %v2121 = vmul.f32 %v2096, %v609
        %v2122 = vmul.f32 %v2098, %v609
        %v2123 = vmul.f32 %v2100, %v609
        %v2124 = vmul.f32 %v2102, %v609
        %v2125 = vmul.f32 %v2104, %v609
        %v2126 = vmul.f32 %v2106, %v609
        %v2127 = vmul.f32 %v2108, %v609
        %v2128 = vmul.f32 %v2110, %v609
        %v2129 = vmul.f32 %v2112, %v609
        %v2130 = vmul.f32 %v2114, %v609
        %v2131 = vmul.f32 %v2051, %v2051
        %v2132 = vmul.f32 %v2052, %v2052
        %v2133 = vmul.f32 %v2053, %v2053
        %v2134 = vmul.f32 %v2054, %v2054
        %v2135 = vmul.f32 %v2055, %v2055
        %v2136 = vmul.f32 %v2056, %v2056
        %v2137 = vmul.f32 %v2057, %v2057
        %v2138 = vmul.f32 %v2058, %v2058
        %v2139 = vmul.f32 %v2059, %v2059
        %v2140 = vmul.f32 %v2060, %v2060
        %v2141 = vmul.f32 %v2061, %v2061
        %v2142 = vmul.f32 %v2062, %v2062
        %v2143 = vmul.f32 %v2063, %v2063
        %v2144 = vmul.f32 %v2064, %v2064
        %v2145 = vmul.f32 %v2065, %v2065
        %v2146 = vmul.f32 %v2066, %v2066
        %v2147 = vsub.f32 %v2115, %v2131
        %v2148 = vsub.f32 %v2116, %v2132
        %v2149 = vsub.f32 %v2117, %v2133
        %v2150 = vsub.f32 %v2118, %v2134
        %v2151 = vsub.f32 %v2119, %v2135
        %v2152 = vsub.f32 %v2120, %v2136
        %v2153 = vsub.f32 %v2121, %v2137
        %v2154 = vsub.f32 %v2122, %v2138
        %v2155 = vsub.f32 %v2123, %v2139
        %v2156 = vsub.f32 %v2124, %v2140
        %v2157 = vsub.f32 %v2125, %v2141
        %v2158 = vsub.f32 %v2126, %v2142
        %v2159 = vsub.f32 %v2127, %v2143
        %v2160 = vsub.f32 %v2128, %v2144
        %v2161 = vsub.f32 %v2129, %v2145
        %v2162 = vsub.f32 %v2130, %v2146
        %v2163 = vmax.f32 %v2147, 0.0
        %v2164 = vmax.f32 %v2148, 0.0
        %v2165 = vmax.f32 %v2149, 0.0
        %v2166 = vmax.f32 %v2150, 0.0
        %v2167 = vmax.f32 %v2151, 0.0
        %v2168 = vmax.f32 %v2152, 0.0
        %v2169 = vmax.f32 %v2153, 0.0
        %v2170 = vmax.f32 %v2154, 0.0
        %v2171 = vmax.f32 %v2155, 0.0
        %v2172 = vmax.f32 %v2156, 0.0
        %v2173 = vmax.f32 %v2157, 0.0
        %v2174 = vmax.f32 %v2158, 0.0
        %v2175 = vmax.f32 %v2159, 0.0
        %v2176 = vmax.f32 %v2160, 0.0
        %v2177 = vmax.f32 %v2161, 0.0
        %v2178 = vmax.f32 %v2162, 0.0
        %v2179 = vsub.f32 %v1955, %v2051
        %v2180 = vsub.f32 %v1958, %v2052
        %v2181 = vsub.f32 %v1963, %v2053
        %v2182 = vsub.f32 %v1966, %v2054
        %v2183 = vsub.f32 %v1971, %v2055
        %v2184 = vsub.f32 %v1974, %v2056
        %v2185 = vsub.f32 %v1979, %v2057
        %v2186 = vsub.f32 %v1982, %v2058
        %v2187 = vsub.f32 %v1987, %v2059
        %v2188 = vsub.f32 %v1990, %v2060
        %v2189 = vsub.f32 %v1995, %v2061
        %v2190 = vsub.f32 %v1998, %v2062
        %v2191 = vsub.f32 %v2003, %v2063
        %v2192 = vsub.f32 %v2006, %v2064
        %v2193 = vsub.f32 %v2011, %v2065
        %v2194 = vsub.f32 %v2014, %v2066
        %v2195 = vadd.f32 %v2163, 1e-05
        %v2196 = vadd.f32 %v2164, 1e-05
        %v2197 = vadd.f32 %v2165, 1e-05
        %v2198 = vadd.f32 %v2166, 1e-05
        %v2199 = vadd.f32 %v2167, 1e-05
        %v2200 = vadd.f32 %v2168, 1e-05
        %v2201 = vadd.f32 %v2169, 1e-05
        %v2202 = vadd.f32 %v2170, 1e-05
        %v2203 = vadd.f32 %v2171, 1e-05
        %v2204 = vadd.f32 %v2172, 1e-05
        %v2205 = vadd.f32 %v2173, 1e-05
        %v2206 = vadd.f32 %v2174, 1e-05
        %v2207 = vadd.f32 %v2175, 1e-05
        %v2208 = vadd.f32 %v2176, 1e-05
        %v2209 = vadd.f32 %v2177, 1e-05
        %v2210 = vadd.f32 %v2178, 1e-05
        %v2211 = vrsqrt.pop %v2195
        %v2212 = vrsqrt.pop %v2196
        %v2213 = vrsqrt.pop %v2197
        %v2214 = vrsqrt.pop %v2198
        %v2215 = vrsqrt.pop %v2199
        %v2216 = vrsqrt.pop %v2200
        %v2217 = vrsqrt.pop %v2201
        %v2218 = vrsqrt.pop %v2202
        %v2219 = vrsqrt.pop %v2203
        %v2220 = vrsqrt.pop %v2204
        %v2221 = vrsqrt.pop %v2205
        %v2222 = vrsqrt.pop %v2206
        %v2223 = vrsqrt.pop %v2207
        %v2224 = vrsqrt.pop %v2208
        %v2225 = vrsqrt.pop %v2209
        %v2226 = vrsqrt.pop %v2210
        %v2227 = vmul.f32 %v2179, %v2211
        %v2228 = vmul.f32 %v2180, %v2212
        %v2229 = vmul.f32 %v2181, %v2213
        %v2230 = vmul.f32 %v2182, %v2214
        %v2231 = vmul.f32 %v2183, %v2215
        %v2232 = vmul.f32 %v2184, %v2216
        %v2233 = vmul.f32 %v2185, %v2217
        %v2234 = vmul.f32 %v2186, %v2218
        %v2235 = vmul.f32 %v2187, %v2219
        %v2236 = vmul.f32 %v2188, %v2220
        %v2237 = vmul.f32 %v2189, %v2221
        %v2238 = vmul.f32 %v2190, %v2222
        %v2239 = vmul.f32 %v2191, %v2223
        %v2240 = vmul.f32 %v2192, %v2224
        %v2241 = vmul.f32 %v2193, %v2225
        %v2242 = vmul.f32 %v2194, %v2226
        %v2244 = vlaneseq
        %v2245 = vshrl.u32 %v2244, 7
        %v2246 = vsub.s32 0, %v2245
        %v2247 = vrot.slane %v2017, %v2246
        %v2249 = vmul.f32 %v2227, %v2247
        %v2250 = vmul.f32 %v2228, %v2247
        %v2251 = vmul.f32 %v2229, %v2247
        %v2252 = vmul.f32 %v2230, %v2247
        %v2253 = vmul.f32 %v2231, %v2247
        %v2254 = vmul.f32 %v2232, %v2247
        %v2255 = vmul.f32 %v2233, %v2247
        %v2256 = vmul.f32 %v2234, %v2247
        %v2257 = vmul.f32 %v2235, %v2247
        %v2258 = vmul.f32 %v2236, %v2247
        %v2259 = vmul.f32 %v2237, %v2247
        %v2260 = vmul.f32 %v2238, %v2247
        %v2261 = vmul.f32 %v2239, %v2247
        %v2262 = vmul.f32 %v2240, %v2247
        %v2263 = vmul.f32 %v2241, %v2247
        %v2264 = vmul.f32 %v2242, %v2247
        %v2266 = vlaneseq
        %v2267 = vshrl.u32 %v2266, 7
        %v2268 = vsub.s32 0, %v2267
        %v2269 = vrot.slane %v2018, %v2268
        %v2271 = vadd.f32 %v2249, %v2269
        %v2272 = vadd.f32 %v2250, %v2269
        %v2273 = vadd.f32 %v2251, %v2269
        %v2274 = vadd.f32 %v2252, %v2269
        %v2275 = vadd.f32 %v2253, %v2269
        %v2276 = vadd.f32 %v2254, %v2269
        %v2277 = vadd.f32 %v2255, %v2269
        %v2278 = vadd.f32 %v2256, %v2269
        %v2279 = vadd.f32 %v2257, %v2269
        %v2280 = vadd.f32 %v2258, %v2269
        %v2281 = vadd.f32 %v2259, %v2269
        %v2282 = vadd.f32 %v2260, %v2269
        %v2283 = vadd.f32 %v2261, %v2269
        %v2284 = vadd.f32 %v2262, %v2269
        %v2285 = vadd.f32 %v2263, %v2269
        %v2286 = vadd.f32 %v2264, %v2269
        %v2287 = vmul.f32 %v2271, 0.5
        %v2288 = vmul.f32 %v2272, 0.5
        %v2289 = vmul.f32 %v2273, 0.5
        %v2290 = vmul.f32 %v2274, 0.5
        %v2291 = vmul.f32 %v2275, 0.5
        %v2292 = vmul.f32 %v2276, 0.5
        %v2293 = vmul.f32 %v2277, 0.5
        %v2294 = vmul.f32 %v2278, 0.5
        %v2295 = vmul.f32 %v2279, 0.5
        %v2296 = vmul.f32 %v2280, 0.5
        %v2297 = vmul.f32 %v2281, 0.5
        %v2298 = vmul.f32 %v2282, 0.5
        %v2299 = vmul.f32 %v2283, 0.5
        %v2300 = vmul.f32 %v2284, 0.5
        %v2301 = vmul.f32 %v2285, 0.5
        %v2302 = vmul.f32 %v2286, 0.5
        %v2303 = vmul.f32 %v2271, 0.70710677
        %v2304 = vmul.f32 %v2272, 0.70710677
        %v2305 = vmul.f32 %v2273, 0.70710677
        %v2306 = vmul.f32 %v2274, 0.70710677
        %v2307 = vmul.f32 %v2275, 0.70710677
        %v2308 = vmul.f32 %v2276, 0.70710677
        %v2309 = vmul.f32 %v2277, 0.70710677
        %v2310 = vmul.f32 %v2278, 0.70710677
        %v2311 = vmul.f32 %v2279, 0.70710677
        %v2312 = vmul.f32 %v2280, 0.70710677
        %v2313 = vmul.f32 %v2281, 0.70710677
        %v2314 = vmul.f32 %v2282, 0.70710677
        %v2315 = vmul.f32 %v2283, 0.70710677
        %v2316 = vmul.f32 %v2284, 0.70710677
        %v2317 = vmul.f32 %v2285, 0.70710677
        %v2318 = vmul.f32 %v2286, 0.70710677
        %v2319 = verf.f32.pop %v2303
        %v2320 = verf.f32.pop %v2304
        %v2321 = verf.f32.pop %v2305
        %v2322 = verf.f32.pop %v2306
        %v2323 = verf.f32.pop %v2307
        %v2324 = verf.f32.pop %v2308
        %v2325 = verf.f32.pop %v2309
        %v2326 = verf.f32.pop %v2310
        %v2327 = verf.f32.pop %v2311
        %v2328 = verf.f32.pop %v2312
        %v2329 = verf.f32.pop %v2313
        %v2330 = verf.f32.pop %v2314
        %v2331 = verf.f32.pop %v2315
        %v2332 = verf.f32.pop %v2316
        %v2333 = verf.f32.pop %v2317
        %v2334 = verf.f32.pop %v2318
        %v2335 = vadd.f32 %v2319, 1.0
        %v2336 = vadd.f32 %v2320, 1.0
        %v2337 = vadd.f32 %v2321, 1.0
        %v2338 = vadd.f32 %v2322, 1.0
        %v2339 = vadd.f32 %v2323, 1.0
        %v2340 = vadd.f32 %v2324, 1.0
        %v2341 = vadd.f32 %v2325, 1.0
        %v2342 = vadd.f32 %v2326, 1.0
        %v2343 = vadd.f32 %v2327, 1.0
        %v2344 = vadd.f32 %v2328, 1.0
        %v2345 = vadd.f32 %v2329, 1.0
        %v2346 = vadd.f32 %v2330, 1.0
        %v2347 = vadd.f32 %v2331, 1.0
        %v2348 = vadd.f32 %v2332, 1.0
        %v2349 = vadd.f32 %v2333, 1.0
        %v2350 = vadd.f32 %v2334, 1.0
        %v2351 = vmul.f32 %v2287, %v2335
        %v2352 = vmul.f32 %v2288, %v2336
        %v2353 = vmul.f32 %v2289, %v2337
        %v2354 = vmul.f32 %v2290, %v2338
        %v2355 = vmul.f32 %v2291, %v2339
        %v2356 = vmul.f32 %v2292, %v2340
        %v2357 = vmul.f32 %v2293, %v2341
        %v2358 = vmul.f32 %v2294, %v2342
        %v2359 = vmul.f32 %v2295, %v2343
        %v2360 = vmul.f32 %v2296, %v2344
        %v2361 = vmul.f32 %v2297, %v2345
        %v2362 = vmul.f32 %v2298, %v2346
        %v2363 = vmul.f32 %v2299, %v2347
        %v2364 = vmul.f32 %v2300, %v2348
        %v2365 = vmul.f32 %v2301, %v2349
        %v2366 = vmul.f32 %v2302, %v2350
        %v2367 = vadd.f32 %v832, %v2351
        %v2368 = vadd.f32 %v833, %v2352
        %v2369 = vadd.f32 %v834, %v2353
        %v2370 = vadd.f32 %v835, %v2354
        %v2371 = vadd.f32 %v836, %v2355
        %v2372 = vadd.f32 %v837, %v2356
        %v2373 = vadd.f32 %v838, %v2357
        %v2374 = vadd.f32 %v839, %v2358
        %v2375 = vadd.f32 %v840, %v2359
        %v2376 = vadd.f32 %v841, %v2360
        %v2377 = vadd.f32 %v842, %v2361
        %v2378 = vadd.f32 %v843, %v2362
        %v2379 = vadd.f32 %v844, %v2363
        %v2380 = vadd.f32 %v845, %v2364
        %v2381 = vadd.f32 %v846, %v2365
        %v2382 = vadd.f32 %v847, %v2366
        %v2383 = vmul.f32 %v2367, 0.5
        %v2384 = vmul.f32 %v2368, 0.5
        %v2385 = vmul.f32 %v2369, 0.5
        %v2386 = vmul.f32 %v2370, 0.5
        %v2387 = vmul.f32 %v2371, 0.5
        %v2388 = vmul.f32 %v2372, 0.5
        %v2389 = vmul.f32 %v2373, 0.5
        %v2390 = vmul.f32 %v2374, 0.5
        %v2391 = vmul.f32 %v2375, 0.5
        %v2392 = vmul.f32 %v2376, 0.5
        %v2393 = vmul.f32 %v2377, 0.5
        %v2394 = vmul.f32 %v2378, 0.5
        %v2395 = vmul.f32 %v2379, 0.5
        %v2396 = vmul.f32 %v2380, 0.5
        %v2397 = vmul.f32 %v2381, 0.5
        %v2398 = vmul.f32 %v2382, 0.5
        %2399 = vst [vmem:[%s557] sm:$0xff] %v2383
        %2400 = vst [vmem:[%s557 + $0x8] sm:$0xff] %v2384
        %2401 = vst [vmem:[%s557 + $0x10] sm:$0xff] %v2385
        %2402 = vst [vmem:[%s557 + $0x18] sm:$0xff] %v2386
        %2403 = vst [vmem:[%s557 + $0x20] sm:$0xff] %v2387
        %2404 = vst [vmem:[%s557 + $0x28] sm:$0xff] %v2388
        %2405 = vst [vmem:[%s557 + $0x30] sm:$0xff] %v2389
        %2406 = vst [vmem:[%s557 + $0x38] sm:$0xff] %v2390
        %2407 = vst [vmem:[%s557 + $0x40] sm:$0xff] %v2391
        %2408 = vst [vmem:[%s557 + $0x48] sm:$0xff] %v2392
        %2409 = vst [vmem:[%s557 + $0x50] sm:$0xff] %v2393
        %2410 = vst [vmem:[%s557 + $0x58] sm:$0xff] %v2394
        %2411 = vst [vmem:[%s557 + $0x60] sm:$0xff] %v2395
        %2412 = vst [vmem:[%s557 + $0x68] sm:$0xff] %v2396
        %2413 = vst [vmem:[%s557 + $0x70] sm:$0xff] %v2397
        %2414 = vst [vmem:[%s557 + $0x78] sm:$0xff] %v2398
        %s2415 = sand.u32 %s362, 1
        %s2416 = scalar_lea.sflag [#allocation4], %s2415
        %s2417 = sand.u32 %s362, 1
        %s2418 = smul.addr %s2417, 128
        %s2419 = scalar_lea.vmem [#allocation10], %s2418
        // Predicated region
        $region97: #{tpu_custom_call.1} parent=79 // pred_check
          %p2420 = pneg %p372
        $region98: #{tpu_custom_call.1} parent=79 // pred_check_branch
          %2422 = sbr.rel (%p2420) target = $region100
        $region99: #{tpu_custom_call.1} parent=79 // pred_region
          %s2423 = smul.u32 8, %s34
          %s2425 = ssub.s32 2048, 2048
          %2426 = vsyncadd %s2416, %s2425
          %s2427 = smul.addr %s2423, 2
          %s2428 = smul.addr %s2427, 128
          %s2429 = scalar_lea.hbm %s15, %s2428
          %s2430 = sshll.u32 %s2419, 4
          %s2431 = int_to_ptr.vmem [resolvable:$true] %s2430
          %2436 = dma.vmem_to_hbm [thread:$0]  %s2431, 2048, %s2429, %s2416, 128, 128, 8
        $region100: #{tpu_custom_call.1} parent=79 // pred_fallthru
          _
      $region80: #{tpu_custom_call.1} parent=5 // pred_fallthru
        _
      %p2437 = scmp.le.s32.totalorder 2, %s29
      // Predicated region
      $region101: #{tpu_custom_call.1} parent=5 // pred_check
        %p2438 = pneg %p2437
      $region102: #{tpu_custom_call.1} parent=5 // pred_check_branch
        %2440 = sbr.rel (%p2438) target = $region104
      $region103: #{tpu_custom_call.1} parent=5 // pred_region
        %s2441 = ssub.s32 %s29, 2
        // Predicated region
        $region105: #{tpu_custom_call.1} parent=103 // pred_check
          %p2442 = pneg %p378
        $region106: #{tpu_custom_call.1} parent=103 // pred_check_branch
          %2444 = sbr.rel (%p2442) target = $region108
        $region107: #{tpu_custom_call.1} parent=103 // pred_region
          %s2445 = sand.u32 %s363, 1
          %s2446 = scalar_lea.sflag [#allocation4], %s2445
          %s2447 = sand.u32 %s363, 1
          %s2448 = smul.addr %s2447, 128
          %s2449 = scalar_lea.vmem [#allocation10], %s2448
          %2450 = dma.done %s2446, 2048
        $region108: #{tpu_custom_call.1} parent=103 // pred_fallthru
          _
      $region104: #{tpu_custom_call.1} parent=5 // pred_fallthru
        _
    $region6: #{tpu_custom_call.1} parent=1 // loop_footer
      %s33 = sadd.s32 1, %s29
    $region7: #{tpu_custom_call.1} parent=1 // loop_footer_branch
      %28 = sbr.rel target = $region3
    $region8: #{tpu_custom_call.1} parent=1 // loop_exit
      _
    %2451 = vsyncpa [#allocation3], 1
    %s2452 = scalar_lea.sflag [#allocation3], 1
    %2453 = vsyncpa %s2452, 1
    %2454 = vsyncpa [#allocation6], 1
    %2455 = vsyncpa [#allocation9], 1
    %2456 = vsyncpa [#allocation4], 1
    %s2457 = scalar_lea.sflag [#allocation4], 1
    %2458 = vsyncpa %s2457, 1

</llo_original>
